<compile_context>
chip_gen: v7x
topology: tpu7x:2x2x1
jax: 0.10.0
libtpu: 0.0.40
codegen_flags: <defaults>
</compile_context>

<pallas_src>
import math
import functools

import jax
import jax.numpy as jnp
from jax import lax
from jax.experimental import pallas as pl
from jax.experimental.pallas import tpu as pltpu


# ----------------------------- ALiBi slopes ---------------------------------
def _get_alibi_slopes(n):
    def get_slopes_power_of_2(n):
        start = 2 ** (-(2 ** (-(math.log2(n) - 3))))
        ratio = start
        return [start * ratio ** i for i in range(n)]

    if math.log2(n).is_integer():
        return get_slopes_power_of_2(n)
    closest = 2 ** math.floor(math.log2(n))
    return (get_slopes_power_of_2(closest)
            + _get_alibi_slopes(2 * closest)[0::2][: n - closest])


# ----------------------------- tile helpers ---------------------------------
def _row_tile(dim, cap):
    """Largest divisor of `dim` <= cap that is a multiple of 8 (or dim itself)."""
    if dim <= cap:
        return dim
    for t in range(cap - cap % 8, 0, -8):
        if dim % t == 0:
            return t
    # TODO(synk): pad prime-ish dims to a tileable size instead of returning
    # one giant block (VMEM risk on v7x's 64 MiB).
    return dim


def _col_tile(dim, cap):
    """Largest divisor of `dim` <= cap that is a multiple of 128 (or dim itself)."""
    if dim <= cap:
        return dim
    for t in range(cap - cap % 128, 0, -128):
        if dim % t == 0:
            return t
    return dim


# ------------------------- Pallas kernel bodies -----------------------------
def _linear_bias_kernel(x_ref, w_ref, b_ref, o_ref, acc_ref, *, compute_dtype):
    # Tiled o = x @ w + b with f32 accumulation; weights are pre-cast to bf16
    # at parameter-prep time, so only the activation is (maybe) cast here.
    @pl.when(pl.program_id(2) == 0)
    def _init():
        acc_ref[...] = jnp.zeros_like(acc_ref)

    acc_ref[...] += jnp.dot(x_ref[...].astype(compute_dtype), w_ref[...],
                            preferred_element_type=jnp.float32)

    @pl.when(pl.program_id(2) == pl.num_programs(2) - 1)
    def _finalize():
        o_ref[...] = (acc_ref[...]
                      + b_ref[...].astype(jnp.float32)).astype(o_ref.dtype)


def _flash_alibi_head_kernel(slopes_ref, q_ref, k_ref, v_ref, o_ref,
                             m_sc, l_sc, acc_sc,
                             *, block_q, block_k, compute_dtype):
    """One (head, q-block, kv-block) step of causal flash attention w/ ALiBi.

    q_ref:        (tq, D) bf16 slice of the qkv slab (scale folded into W_q)
    k_ref/v_ref:  (tk, D) bf16 slices; kv block index clamped at the diagonal
    o_ref:        (tq, D) slice of the lane-dense (T, hidden) output slab
    """
    h = pl.program_id(0)
    qi = pl.program_id(1)
    ki = pl.program_id(2)

    @pl.when(ki == 0)
    def _init():
        m_sc[...] = jnp.full_like(m_sc, -jnp.inf)
        l_sc[...] = jnp.zeros_like(l_sc)
        acc_sc[...] = jnp.zeros_like(acc_sc)

    def _update(is_diagonal):
        # Scores on the MXU, f32 accumulation: (tq, D) x (tk, D)^T -> (tq, tk)
        s = lax.dot_general(q_ref[...], k_ref[...],
                            (((1,), (1,)), ((), ())),
                            preferred_element_type=jnp.float32)

        # ALiBi in shift-invariant form: slope*(col-row) -> slope*col; the
        # per-row -slope*row term is constant along kv and cancels in softmax.
        cols = ki * block_k + lax.broadcasted_iota(jnp.int32, (1, block_k), 1)
        slope = slopes_ref[h]
        s = s + slope * cols.astype(jnp.float32)

        if is_diagonal:
            # Only the diagonal block (tq == tk) needs the causal mask.
            rows = qi * block_q + lax.broadcasted_iota(
                jnp.int32, (block_q, 1), 0)
            s = jnp.where(cols <= rows, s, -1e30)

        # Online softmax update (stats in f32).  exp kept in f32 so the same
        # kernel is safe on v5e; on v6e/v7x a bf16 exp input would ~2x EUP.
        m_prev = m_sc[...]
        m_new = jnp.maximum(m_prev, jnp.max(s, axis=-1, keepdims=True))
        alpha = jnp.exp(m_prev - m_new)
        p = jnp.exp(s - m_new)
        l_sc[...] = alpha * l_sc[...] + jnp.sum(p, axis=-1, keepdims=True)
        acc_sc[...] = alpha * acc_sc[...] + jnp.dot(
            p.astype(compute_dtype), v_ref[...],
            preferred_element_type=jnp.float32)
        m_sc[...] = m_new

        if is_diagonal:
            # ki == qi is the last block with unmasked work for this
            # (head, q-block): normalize once (EUP reciprocal) and store the
            # lane-dense 128-wide output slice.  Later (skipped) ki steps do
            # not touch o_ref; Pallas writes it back when the block changes.
            inv_l = pl.reciprocal(l_sc[...], approx=True)
            o_ref[...] = (acc_sc[...] * inv_l).astype(o_ref.dtype)

    @pl.when(ki < qi)
    def _off_diagonal():
        _update(is_diagonal=False)

    @pl.when(ki == qi)
    def _diagonal():
        _update(is_diagonal=True)


# ------------------------------- wrappers ------------------------------------
def linear_bias(x, w, b, *, out_dtype=None, compute_dtype=jnp.bfloat16,
                block_m=256, block_n=512, block_k=512):
    T, K = x.shape
    Kw, N = w.shape
    assert K == Kw and b.shape == (1, N)
    out_dtype = x.dtype if out_dtype is None else out_dtype

    tm = _row_tile(T, block_m)
    tn = _col_tile(N, block_n)
    tk = _col_tile(K, block_k)
    grid = (T // tm, N // tn, K // tk)

    return pl.pallas_call(
        functools.partial(_linear_bias_kernel, compute_dtype=compute_dtype),
        out_shape=jax.ShapeDtypeStruct((T, N), out_dtype),
        grid=grid,
        in_specs=[
            pl.BlockSpec((tm, tk), lambda i, j, k: (i, k)),
            pl.BlockSpec((tk, tn), lambda i, j, k: (k, j)),
            pl.BlockSpec((1, tn), lambda i, j, k: (0, j)),
        ],
        out_specs=pl.BlockSpec((tm, tn), lambda i, j, k: (i, j)),
        scratch_shapes=[pltpu.VMEM((tm, tn), jnp.float32)],
        compiler_params=pltpu.CompilerParams(
            dimension_semantics=("parallel", "parallel", "arbitrary")),
    )(x, w, b)


def alibi_attention(qkv, slopes, *, num_heads, head_dim, out_dtype,
                    compute_dtype=jnp.bfloat16, block_q=128, block_k=128):
    """Causal flash attention with ALiBi, reading q/k/v directly out of the
    (T, 3*hidden) c_attn slab.  Output: lane-dense (T, hidden)."""
    T, three_hidden = qkv.shape
    H, D = num_heads, head_dim
    hidden = H * D
    assert three_hidden == 3 * hidden
    assert D % 128 == 0, "direct qkv-slab reads require head_dim % 128 == 0"
    # TODO(synk): head_dim < 128 would need the head-batched (H, tq, D) layout.

    t = _row_tile(T, min(block_q, block_k))   # square blocks -> causal skip
    tq = tk = t
    grid = (H, T // tq, T // tk)

    # K/V block index is clamped at the causal diagonal: for ki > qi the index
    # repeats the previous one, so the pipeline skips the DMA entirely; the
    # matching pl.when in the kernel skips the compute.
    q_spec = pl.BlockSpec((tq, D), lambda h, qi, ki, s: (qi, h))
    k_spec = pl.BlockSpec(
        (tk, D), lambda h, qi, ki, s: (jnp.minimum(ki, qi), H + h))
    v_spec = pl.BlockSpec(
        (tk, D), lambda h, qi, ki, s: (jnp.minimum(ki, qi), 2 * H + h))

    kernel = functools.partial(_flash_alibi_head_kernel, block_q=tq,
                               block_k=tk, compute_dtype=compute_dtype)

    return pl.pallas_call(
        kernel,
        out_shape=jax.ShapeDtypeStruct((T, hidden), out_dtype),
        grid_spec=pltpu.PrefetchScalarGridSpec(
            num_scalar_prefetch=1,                 # ALiBi slopes -> SMEM
            grid=grid,
            in_specs=[q_spec, k_spec, v_spec],
            out_specs=pl.BlockSpec((tq, D), lambda h, qi, ki, s: (qi, h)),
            scratch_shapes=[
                pltpu.VMEM((tq, 1), jnp.float32),   # running max
                pltpu.VMEM((tq, 1), jnp.float32),   # running sum
                pltpu.VMEM((tq, D), jnp.float32),   # output accumulator
            ]),
        compiler_params=pltpu.CompilerParams(
            dimension_semantics=("parallel", "parallel", "arbitrary")),
    )(slopes, qkv, qkv, qkv)


def prepare_params(params, num_heads, head_dim, scale,
                   compute_dtype=jnp.bfloat16):
    """One-time parameter prep: fold the attention scale into the Q slice of
    c_attn (exact for power-of-two head_dim, done in f32), and pre-cast the
    weight matrices to bf16 so the kernels stream half the bytes and skip the
    per-tile casts.  Biases stay f32 (added post-accumulation)."""
    hidden = num_heads * head_dim
    w_attn = jnp.asarray(params["w_attn"], jnp.float32)
    b_attn = jnp.asarray(params["b_attn"], jnp.float32)
    w_attn = w_attn.at[:, :hidden].multiply(scale)
    b_attn = b_attn.at[:, :hidden].multiply(scale)
    return {
        "w_attn": w_attn.astype(compute_dtype),
        "b_attn": b_attn,
        "w_proj": jnp.asarray(params["w_proj"], jnp.float32).astype(compute_dtype),
        "b_proj": jnp.asarray(params["b_proj"], jnp.float32),
        "alibi_slopes": jnp.asarray(params["alibi_slopes"],
                                    jnp.float32).reshape(num_heads),
    }


def jais_attention_forward(hidden_states, prepared, num_heads, head_dim):
    T, hidden = hidden_states.shape
    out_dtype = hidden_states.dtype

    # --- c_attn: bf16 (T, 3*hidden) slab; Q columns already carry the scale ---
    qkv = linear_bias(hidden_states, prepared["w_attn"], prepared["b_attn"],
                      out_dtype=jnp.bfloat16)

    # --- flash attention with ALiBi + causal mask; q/k/v read straight out of
    #     the qkv slab with lane-aligned per-head column blocks (no relayout) ---
    attn = alibi_attention(qkv, prepared["alibi_slopes"],
                           num_heads=num_heads, head_dim=head_dim,
                           out_dtype=jnp.bfloat16)

    # --- c_proj back to the input dtype ---
    return linear_bias(attn, prepared["w_proj"], prepared["b_proj"],
                       out_dtype=out_dtype)


# ------------------------------- reference -----------------------------------
def reference_forward(hidden_states, params, num_heads, head_dim, scale):
    T, hidden = hidden_states.shape
    qkv = hidden_states @ params["w_attn"] + params["b_attn"][0]
    q, k, v = jnp.split(qkv, 3, axis=-1)

    def to_heads(x):
        return x.reshape(T, num_heads, head_dim).transpose(1, 0, 2)

    q, k, v = to_heads(q), to_heads(k), to_heads(v)
    s = jnp.einsum("htd,hsd->hts", q, k) * scale
    row = jnp.arange(T)[:, None]
    col = jnp.arange(T)[None, :]
    alibi = params["alibi_slopes"][:, :, None] * (col - row)[None].astype(jnp.float32)
    s = s + alibi
    s = jnp.where((col <= row)[None], s, -1e30)
    p = jax.nn.softmax(s, axis=-1)
    o = jnp.einsum("hts,hsd->htd", p, v).transpose(1, 0, 2).reshape(T, hidden)
    return o @ params["w_proj"] + params["b_proj"][0]


# --------------------------------- main ---------------------------------------
if __name__ == "__main__":
    # Small JAIS-like config.  head_dim is kept at the real JAIS value (128)
    # so the lane-aligned direct-slab reads and per-head 128-wide output
    # stores are exercised; seq_len=256 exercises multi-block flash + causal
    # DMA/compute skipping (2 q-blocks x 2 kv-blocks per head).
    hidden_size = 256
    num_heads = 2
    head_dim = hidden_size // num_heads      # 128
    seq_len = 256
    # mup_scale_qk_dot_by_d = True  ->  attn_scale_power = 1.0
    scale = float(head_dim) ** -1.0

    key = jax.random.PRNGKey(0)
    k_x, k_wa, k_ba, k_wp, k_bp = jax.random.split(key, 5)

    hidden_states = jax.random.normal(k_x, (seq_len, hidden_size), jnp.float32)

    params = {
        "w_attn": 0.02 * jax.random.normal(k_wa, (hidden_size, 3 * hidden_size), jnp.float32),
        "b_attn": 0.01 * jax.random.normal(k_ba, (1, 3 * hidden_size), jnp.float32),
        "w_proj": 0.02 * jax.random.normal(k_wp, (hidden_size, hidden_size), jnp.float32),
        "b_proj": 0.01 * jax.random.normal(k_bp, (1, hidden_size), jnp.float32),
        "alibi_slopes": jnp.asarray(_get_alibi_slopes(num_heads), jnp.float32).reshape(num_heads, 1),
    }

    prepared = prepare_params(params, num_heads, head_dim, scale)

    out = jais_attention_forward(hidden_states, prepared, num_heads, head_dim)
    out = jax.block_until_ready(out)

    ref = reference_forward(hidden_states, params, num_heads, head_dim, scale)
    assert out.shape == (seq_len, hidden_size)
    assert jnp.allclose(out, ref, atol=2e-2, rtol=2e-2), "mismatch vs reference"

    print("KERNEL_OK")
</pallas_src>

<mosaic_0001>
module attributes {stable_mosaic.version = 11 : i64} {
  func.func @_linear_bias_kernel(%arg0: i32, %arg1: i32, %arg2: i32, %arg3: memref<256x256xf32, #tpu.memory_space<vmem>>, %arg4: memref<256x384xbf16, #tpu.memory_space<vmem>>, %arg5: memref<1x384xf32, #tpu.memory_space<vmem>>, %arg6: memref<256x384xbf16, #tpu.memory_space<vmem>>, %arg7: memref<256x384xf32, #tpu.memory_space<vmem>>) attributes {dimension_semantics = [#tpu.dimension_semantics<parallel>, #tpu.dimension_semantics<parallel>, #tpu.dimension_semantics<arbitrary>], iteration_bounds = array<i64: 1, 2, 1>, scalar_prefetch = 0 : i64, scratch_operands = 1 : i64, tpu.core_type = #tpu.core_type<tc>, window_params = [{transform_indices = @transform_0, window_bounds = array<i64: 256, 256>}, {transform_indices = @transform_1, window_bounds = array<i64: 256, 384>}, {transform_indices = @transform_2, window_bounds = array<i64: 1, 384>}, {transform_indices = @transform_3, window_bounds = array<i64: 256, 384>}]} {
    %c0_i32 = arith.constant 0 : i32
    %0 = arith.cmpi eq, %arg2, %c0_i32 : i32
    %1 = arith.extui %0 : i1 to i32
    %c0_i32_0 = arith.constant 0 : i32
    %2 = arith.cmpi ne, %1, %c0_i32_0 : i32
    scf.if %2 {
      %cst_10 = arith.constant 0.000000e+00 : f32
      %13 = vector.broadcast %cst_10 : f32 to vector<256x384xf32>
      %c0_11 = arith.constant 0 : index
      %c0_12 = arith.constant 0 : index
      %14 = vector.load %arg7[%c0_11, %c0_12] : memref<256x384xf32, #tpu.memory_space<vmem>>, vector<256x384xf32>
      tpu.vector_store %arg7[%c0_11, %c0_12], %13 {strides = array<i32>} : memref<256x384xf32, #tpu.memory_space<vmem>>, vector<256x384xf32>,
    } else {
    }
    %c0 = arith.constant 0 : index
    %c0_1 = arith.constant 0 : index
    %3 = vector.load %arg7[%c0, %c0_1] : memref<256x384xf32, #tpu.memory_space<vmem>>, vector<256x384xf32>
    %c0_2 = arith.constant 0 : index
    %c0_3 = arith.constant 0 : index
    %4 = vector.load %arg3[%c0_2, %c0_3] : memref<256x256xf32, #tpu.memory_space<vmem>>, vector<256x256xf32>
    %5 = arith.truncf %4 : vector<256x256xf32> to vector<256x256xbf16>
    %c0_4 = arith.constant 0 : index
    %c0_5 = arith.constant 0 : index
    %6 = vector.load %arg4[%c0_4, %c0_5] : memref<256x384xbf16, #tpu.memory_space<vmem>>, vector<256x384xbf16>
    %cst = arith.constant dense<0.000000e+00> : vector<256x384xf32>
    %7 = tpu.matmul %5, %6, %cst {dimension_numbers = #tpu.dot_dimension_numbers<[1], [0], [0], [1], [0, 0, 1, 1], [], []>} : vector<256x256xbf16>, vector<256x384xbf16>, vector<256x384xf32> -> vector<256x384xf32>
    %8 = arith.addf %3, %7 : vector<256x384xf32>
    %c0_6 = arith.constant 0 : index
    %c0_7 = arith.constant 0 : index
    %9 = vector.load %arg7[%c0_6, %c0_7] : memref<256x384xf32, #tpu.memory_space<vmem>>, vector<256x384xf32>
    tpu.vector_store %arg7[%c0_6, %c0_7], %8 {strides = array<i32>} : memref<256x384xf32, #tpu.memory_space<vmem>>, vector<256x384xf32>,
    %c0_i32_8 = arith.constant 0 : i32
    %10 = arith.cmpi eq, %arg2, %c0_i32_8 : i32
    %11 = arith.extui %10 : i1 to i32
    %c0_i32_9 = arith.constant 0 : i32
    %12 = arith.cmpi ne, %11, %c0_i32_9 : i32
    scf.if %12 {
      %c0_10 = arith.constant 0 : index
      %c0_11 = arith.constant 0 : index
      %13 = vector.load %arg7[%c0_10, %c0_11] : memref<256x384xf32, #tpu.memory_space<vmem>>, vector<256x384xf32>
      %c0_12 = arith.constant 0 : index
      %c0_13 = arith.constant 0 : index
      %14 = vector.load %arg5[%c0_12, %c0_13] : memref<1x384xf32, #tpu.memory_space<vmem>>, vector<1x384xf32>
      %15 = vector.broadcast %14 : vector<1x384xf32> to vector<256x384xf32>
      %16 = arith.addf %13, %15 : vector<256x384xf32>
      %17 = arith.truncf %16 : vector<256x384xf32> to vector<256x384xbf16>
      %c0_14 = arith.constant 0 : index
      %c0_15 = arith.constant 0 : index
      %18 = vector.load %arg6[%c0_14, %c0_15] : memref<256x384xbf16, #tpu.memory_space<vmem>>, vector<256x384xbf16>
      tpu.vector_store %arg6[%c0_14, %c0_15], %17 {strides = array<i32>} : memref<256x384xbf16, #tpu.memory_space<vmem>>, vector<256x384xbf16>,
    } else {
    }
    return
  }
  func.func @transform_0(%arg0: i32, %arg1: i32, %arg2: i32) -> (i32, i32) {
    %c0_i32 = arith.constant 0 : i32
    return %arg0, %arg2 : i32, i32
  }
  func.func @transform_1(%arg0: i32, %arg1: i32, %arg2: i32) -> (i32, i32) {
    %c0_i32 = arith.constant 0 : i32
    return %arg2, %arg1 : i32, i32
  }
  func.func @transform_2(%arg0: i32, %arg1: i32, %arg2: i32) -> (i32, i32) {
    %c0_i32 = arith.constant 0 : i32
    %c0_i32_0 = arith.constant 0 : i32
    return %c0_i32, %arg1 : i32, i32
  }
  func.func @transform_3(%arg0: i32, %arg1: i32, %arg2: i32) -> (i32, i32) {
    %c0_i32 = arith.constant 0 : i32
    return %arg0, %arg1 : i32, i32
  }
}

</mosaic_0001>

<llo_original>
// kernel: tpu_custom_call.1
$region0: #{tpu_custom_call.1}
  #allocation0 [shape = 'u32[]', space=smem, size = 0x4, offset = 0x4, fixed_abs, tag = 'smem constant byte address 0x4 - core index']
  #allocation1 [shape = 'u32[144,128]{1,0:T(1,128)}', space=vmem, size = 0x12000, scoped, tag = 'internal scratch']
  #allocation2 [shape = 'f32[256,384]{1,0:T(8,128)}', space=vmem, size = 0x60000, scoped, tag = 'scratch operand']
  %s0 = inlined_call_operand.hbm [shape: f32[256,256], index: 0, kind: input, shape index: {}]
  %s1 = inlined_call_operand.hbm [shape: bf16[256,768], index: 1, kind: input, shape index: {}]
  %s2 = inlined_call_operand.vmem [shape: f32[1,768], index: 2, kind: input, shape index: {}]
  %s3 = inlined_call_operand.hbm [shape: bf16[256,768], index: 3, kind: output, shape index: {}]
  %s4 = sld [smem:[#allocation0]]
  $region61: #{tpu_custom_call.1} parent=0
    _
  %s6 = ssub.s32 1, %s4
  %s7 = scalar_select 0, %s6, %s4
  $region1: #{tpu_custom_call.1} parent=0
    #allocation3 [shape = 'u8[262144]{0}', space=vmem, size = 0x40000, scoped, tag = 'input window, operand 0, single buffered']
    #allocation4 [shape = 's32[2]{0}', space=sflag, size = 0x8, scoped, tag = 'scoped memory for tpu_custom_call.1']
    #allocation5 [shape = 's32[2]{0}', space=sflag, size = 0x8, scoped, tag = 'scoped memory for tpu_custom_call.1']
    #allocation6 [shape = 'u8[393216]{0}', space=vmem, size = 0x60000, scoped, tag = 'input window, operand 1']
    #allocation7 [shape = 's32[2]{0}', space=sflag, size = 0x8, scoped, tag = 'scoped memory for tpu_custom_call.1']
    #allocation8 [shape = 'u8[393216]{0}', space=vmem, size = 0x60000, scoped, tag = 'output window, operand 0']
    %8 = vsyncpa [#allocation4], 0
    %9 = vsyncpa [#allocation7], 0
    %s10 = scalar_lea.sflag [#allocation7], 1
    %11 = vsyncpa %s10, 0
    %12 = vsyncpa [#allocation5], 0
    %s13 = scalar_lea.sflag [#allocation5], 1
    %14 = vsyncpa %s13, 0
    loop: start=0, step=1, limit=4
    $region2: #{tpu_custom_call.1} parent=1 // loop_pre_header
      _
    $region3: #{tpu_custom_call.1} parent=1 // loop_header
      %s16 = sphi 0, %s20
      %p17 = scmp.ge.s32.totalorder %s16, 4
      %s23 = sphi 0, %s42
      %s24 = sphi 0, %s38
      %s25 = sphi 0, %s34
      %s26 = sphi 0, %s23
      %s27 = sphi 0, %s24
      %s28 = sphi 0, %s25
      %s29 = sphi 0, %s26
      %s30 = sphi 0, %s27
      %s31 = sphi 0, %s28
      %s47 = sphi 0, %s49
      %s50 = sphi 0, %s47
      %s51 = sphi 0, %s50
      %s67 = sphi 0, %s51
      %s75 = sphi 0, %s77
      %s78 = sphi 0, %s75
      %s79 = sphi 0, %s78
      %s95 = sphi 0, %s79
      %s101 = sphi 0, %s103
      %s104 = sphi 0, %s101
      %s105 = sphi 0, %s104
      %s121 = sphi 0, %s105
      %s129 = sphi 0, %s131
      %s132 = sphi 0, %s129
      %s133 = sphi 0, %s132
      %s149 = sphi 0, %s133
    $region4: #{tpu_custom_call.1} parent=1 // loop_header_branch
      %19 = sbr.rel (%p17) target = $region8
    $region5: #{tpu_custom_call.1} parent=1 // loop_body
      %s21 = ssub.s32 %s16, 1
      %s22 = ssub.s32 %s16, 2
      %s32 = sadd.s32 1, %s25
      %p33 = scmp.ge.s32.totalorder %s32, 1
      %s34 = scalar_select %p33, 0, %s32
      %s35 = sadd.s32 1, %s24
      %s36 = scalar_select %p33, %s35, %s24
      %p37 = scmp.ge.s32.totalorder %s36, 2
      %s38 = scalar_select %p37, 0, %s36
      %s39 = sadd.s32 1, %s23
      %s40 = scalar_select %p37, %s39, %s23
      %p41 = scmp.ge.s32.totalorder %s40, 1
      %s42 = scalar_select %p41, 0, %s40
      %s43 = ssub.s32 %s23, %s42
      %s44 = ssub.s32 %s25, %s34
      %s45 = sor.u32 %s43, %s44
      %p46 = scmp.eq.s32.totalorder %s45, 0
      %s48 = sadd.s32 %s47, 1
      %s49 = scalar_select %p46, %s47, %s48
      %p52 = pneg %p46
      %p53 = scmp.eq.s32.totalorder %s16, 1
      %p54 = por %p52, %p53
      %p55 = scmp.ne.s32.totalorder %s47, %s50
      %p56 = scmp.eq.s32.totalorder %s16, 0
      %p57 = por %p55, %p56
      %p58 = scmp.ne.s32.totalorder %s47, %s50
      %p59 = scmp.eq.s32.totalorder %s21, 1
      %p60 = por %p58, %p59
      %p61 = scmp.ne.s32.totalorder %s50, %s51
      %p62 = scmp.eq.s32.totalorder %s21, 0
      %p63 = por %p61, %p62
      %p64 = scmp.ne.s32.totalorder %s50, %s51
      %p65 = scmp.eq.s32.totalorder %s22, 1
      %p66 = por %p64, %p65
      %p68 = scmp.ne.s32.totalorder %s51, %s67
      %p69 = scmp.eq.s32.totalorder %s22, 0
      %p70 = por %p68, %p69
      %s71 = ssub.s32 %s25, %s34
      %s72 = ssub.s32 %s24, %s38
      %s73 = sor.u32 %s71, %s72
      %p74 = scmp.eq.s32.totalorder %s73, 0
      %s76 = sadd.s32 %s75, 1
      %s77 = scalar_select %p74, %s75, %s76
      %p80 = pneg %p74
      %p81 = scmp.eq.s32.totalorder %s16, 1
      %p82 = por %p80, %p81
      %p83 = scmp.ne.s32.totalorder %s75, %s78
      %p84 = scmp.eq.s32.totalorder %s16, 0
      %p85 = por %p83, %p84
      %p86 = scmp.ne.s32.totalorder %s75, %s78
      %p87 = scmp.eq.s32.totalorder %s21, 1
      %p88 = por %p86, %p87
      %p89 = scmp.ne.s32.totalorder %s78, %s79
      %p90 = scmp.eq.s32.totalorder %s21, 0
      %p91 = por %p89, %p90
      %p92 = scmp.ne.s32.totalorder %s78, %s79
      %p93 = scmp.eq.s32.totalorder %s22, 1
      %p94 = por %p92, %p93
      %p96 = scmp.ne.s32.totalorder %s79, %s95
      %p97 = scmp.eq.s32.totalorder %s22, 0
      %p98 = por %p96, %p97
      %s99 = ssub.s32 %s24, %s38
      %p100 = scmp.eq.s32.totalorder %s99, 0
      %s102 = sadd.s32 %s101, 1
      %s103 = scalar_select %p100, %s101, %s102
      %p106 = pneg %p100
      %p107 = scmp.eq.s32.totalorder %s16, 1
      %p108 = por %p106, %p107
      %p109 = scmp.ne.s32.totalorder %s101, %s104
      %p110 = scmp.eq.s32.totalorder %s16, 0
      %p111 = por %p109, %p110
      %p112 = scmp.ne.s32.totalorder %s101, %s104
      %p113 = scmp.eq.s32.totalorder %s21, 1
      %p114 = por %p112, %p113
      %p115 = scmp.ne.s32.totalorder %s104, %s105
      %p116 = scmp.eq.s32.totalorder %s21, 0
      %p117 = por %p115, %p116
      %p118 = scmp.ne.s32.totalorder %s104, %s105
      %p119 = scmp.eq.s32.totalorder %s22, 1
      %p120 = por %p118, %p119
      %p122 = scmp.ne.s32.totalorder %s105, %s121
      %p123 = scmp.eq.s32.totalorder %s22, 0
      %p124 = por %p122, %p123
      %s125 = ssub.s32 %s23, %s42
      %s126 = ssub.s32 %s24, %s38
      %s127 = sor.u32 %s125, %s126
      %p128 = scmp.eq.s32.totalorder %s127, 0
      %s130 = sadd.s32 %s129, 1
      %s131 = scalar_select %p128, %s129, %s130
      %p134 = pneg %p128
      %p135 = scmp.eq.s32.totalorder %s16, 1
      %p136 = por %p134, %p135
      %p137 = scmp.ne.s32.totalorder %s129, %s132
      %p138 = scmp.eq.s32.totalorder %s16, 0
      %p139 = por %p137, %p138
      %p140 = scmp.ne.s32.totalorder %s129, %s132
      %p141 = scmp.eq.s32.totalorder %s21, 1
      %p142 = por %p140, %p141
      %p143 = scmp.ne.s32.totalorder %s132, %s133
      %p144 = scmp.eq.s32.totalorder %s21, 0
      %p145 = por %p143, %p144
      %p146 = scmp.ne.s32.totalorder %s132, %s133
      %p147 = scmp.eq.s32.totalorder %s22, 1
      %p148 = por %p146, %p147
      %p150 = scmp.ne.s32.totalorder %s133, %s149
      %p151 = scmp.eq.s32.totalorder %s22, 0
      %p152 = por %p150, %p151
      %p153 = scmp.le.s32.totalorder 1, %s16
      %p154 = scmp.lt.s32.totalorder %s16, 3
      %p155 = pnand %p153, %p154
      %p156 = pneg %p155
      // Predicated region
      $region9: #{tpu_custom_call.1} parent=5 // pred_check
        _
      $region10: #{tpu_custom_call.1} parent=5 // pred_check_branch
        %158 = sbr.rel (%p155) target = $region12
      $region11: #{tpu_custom_call.1} parent=5 // pred_region
        %s159 = ssub.s32 %s16, 1
        // Predicated region
        $region13: #{tpu_custom_call.1} parent=11 // pred_check
          %p160 = pneg %p63
        $region14: #{tpu_custom_call.1} parent=11 // pred_check_branch
          %162 = sbr.rel (%p160) target = $region16
        $region15: #{tpu_custom_call.1} parent=11 // pred_region
          %s163 = smul.u32 32, %s26
          %s164 = smul.u32 2, %s28
          %s166 = ssub.s32 8192, 8192
          %167 = vsyncadd [#allocation4], %s166
          %s168 = smul.addr %s163, 2
          %s169 = sadd.s32 %s164, %s168
          %s170 = smul.addr %s169, 128
          %s171 = scalar_lea.hbm %s0, %s170
          %s172 = sshll.u32 [#allocation3], 4
          %s173 = int_to_ptr.vmem [resolvable:$true] %s172
          %178 = dma.hbm_to_vmem [thread:$0]  %s171, 8192, %s173, [#allocation4], 256, 256, 16
        $region16: #{tpu_custom_call.1} parent=11 // pred_fallthru
          _
      $region12: #{tpu_custom_call.1} parent=5 // pred_fallthru
        _
      %p179 = scmp.lt.s32.totalorder %s16, 2
      // Predicated region
      $region17: #{tpu_custom_call.1} parent=5 // pred_check
        %p180 = pneg %p179
      $region18: #{tpu_custom_call.1} parent=5 // pred_check_branch
        %182 = sbr.rel (%p180) target = $region20
      $region19: #{tpu_custom_call.1} parent=5 // pred_region
        // Predicated region
        $region21: #{tpu_custom_call.1} parent=19 // pred_check
          %p183 = pneg %p85
        $region22: #{tpu_custom_call.1} parent=19 // pred_check_branch
          %185 = sbr.rel (%p183) target = $region24
        $region23: #{tpu_custom_call.1} parent=19 // pred_region
          %s186 = sand.u32 %s75, 1
          %s187 = scalar_lea.sflag [#allocation7], %s186
          %s188 = sand.u32 %s75, 1
          %s189 = smul.addr %s188, 384
          %s190 = scalar_lea.vmem [#allocation6], %s189
          %s191 = smul.u32 32, %s25
          %s192 = smul.u32 3, %s24
          %s194 = ssub.s32 6144, 6144
          %195 = vsyncadd %s187, %s194
          %s196 = smul.addr %s191, 6
          %s197 = sadd.s32 %s192, %s196
          %s198 = smul.addr %s197, 64
          %s199 = scalar_lea.hbm %s1, %s198
          %s200 = sshll.u32 %s190, 4
          %s201 = int_to_ptr.vmem [resolvable:$true] %s200
          %206 = dma.hbm_to_vmem [thread:$0]  %s199, 6144, %s201, %s187, 384, 192, 12
        $region24: #{tpu_custom_call.1} parent=19 // pred_fallthru
          _
        // Predicated region
        $region25: #{tpu_custom_call.1} parent=19 // pred_check
          %p207 = pneg %p111
        $region26: #{tpu_custom_call.1} parent=19 // pred_check_branch
          %209 = sbr.rel (%p207) target = $region28
        $region27: #{tpu_custom_call.1} parent=19 // pred_region
          %s210 = smul.u32 3, %s24
          %p211 = scmp.lt.s32.totalorder %s210, 5
          %s212 = scalar_select %p211, %s210, 5
          %s213 = scalar_lea.vmem %s2, %s212
          %s214 = smul.u32 3, %s24
        $region28: #{tpu_custom_call.1} parent=19 // pred_fallthru
          _
      $region20: #{tpu_custom_call.1} parent=5 // pred_fallthru
        _
      %p215 = scmp.le.s32.totalorder 1, %s16
      %p216 = scmp.lt.s32.totalorder %s16, 3
      %p217 = pnand %p215, %p216
      %p218 = pneg %p217
      // Predicated region
      $region29: #{tpu_custom_call.1} parent=5 // pred_check
        _
      $region30: #{tpu_custom_call.1} parent=5 // pred_check_branch
        %220 = sbr.rel (%p217) target = $region32
      $region31: #{tpu_custom_call.1} parent=5 // pred_region
        %s221 = ssub.s32 %s16, 1
        // Predicated region
        $region33: #{tpu_custom_call.1} parent=31 // pred_check
          %p222 = pneg %p63
        $region34: #{tpu_custom_call.1} parent=31 // pred_check_branch
          %224 = sbr.rel (%p222) target = $region36
        $region35: #{tpu_custom_call.1} parent=31 // pred_region
          %225 = dma.done [#allocation4], 8192
        $region36: #{tpu_custom_call.1} parent=31 // pred_fallthru
          _
        %s226 = sand.u32 %s78, 1
        %s227 = scalar_lea.sflag [#allocation7], %s226
        %s228 = sand.u32 %s78, 1
        %s229 = smul.addr %s228, 384
        %s230 = scalar_lea.vmem [#allocation6], %s229
        // Predicated region
        $region37: #{tpu_custom_call.1} parent=31 // pred_check
          %p231 = pneg %p91
        $region38: #{tpu_custom_call.1} parent=31 // pred_check_branch
          %233 = sbr.rel (%p231) target = $region40
        $region39: #{tpu_custom_call.1} parent=31 // pred_region
          %234 = dma.done %s227, 6144
        $region40: #{tpu_custom_call.1} parent=31 // pred_fallthru
          _
        %p235 = pneg %p63
        %p236 = pneg %p60
        %s237 = sand.u32 %s78, 1
        %s238 = scalar_lea.sflag [#allocation7], %s237
        %s239 = sand.u32 %s78, 1
        %s240 = smul.addr %s239, 384
        %s241 = scalar_lea.vmem [#allocation6], %s240
        %p242 = pneg %p91
        %p243 = pneg %p88
        %s244 = smul.u32 3, %s27
        %p245 = scmp.lt.s32.totalorder %s244, 5
        %s246 = scalar_select %p245, %s244, 5
        %s247 = scalar_lea.vmem %s2, %s246
        %p248 = pneg %p117
        %p249 = pneg %p114
        %p250 = pneg %p145
        %p251 = pneg %p142
        %s252 = sand.u32 %s132, 1
        %s253 = scalar_lea.sflag [#allocation5], %s252
        %s254 = sand.u32 %s132, 1
        %s255 = smul.addr %s254, 384
        %s256 = scalar_lea.vmem [#allocation8], %s255
        %s257 = smul.u32 32, %s26
        %s258 = smul.u32 2, %s28
        %s259 = smul.u32 32, %s28
        %s260 = smul.u32 3, %s27
        %s261 = smul.u32 3, %s27
        %p262 = scmp.lt.s32.totalorder %s261, 5
        %s263 = scalar_select %p262, %s261, 5
        %s264 = scalar_lea.vmem %s2, %s263
        %s265 = smul.u32 3, %s27
        %s266 = smul.u32 32, %s26
        %s267 = smul.u32 3, %s27
        %p269 = scmp.eq.s32.totalorder %s28, 0
        // Predicated region
        $region41: #{tpu_custom_call.1} parent=31 // pred_check
          %p270 = pneg %p269
        $region42: #{tpu_custom_call.1} parent=31 // pred_check_branch
          %272 = sbr.rel (%p270) target = $region44
        $region43: #{tpu_custom_call.1} parent=31 // pred_region
          %273 = vst [vmem:[#allocation2] sm:$0xff] 0.0
          %274 = vst [vmem:[#allocation2 + $0x8] sm:$0xff] 0.0
          %275 = vst [vmem:[#allocation2 + $0x10] sm:$0xff] 0.0
          %276 = vst [vmem:[#allocation2 + $0x18] sm:$0xff] 0.0
          %277 = vst [vmem:[#allocation2 + $0x20] sm:$0xff] 0.0
          %278 = vst [vmem:[#allocation2 + $0x28] sm:$0xff] 0.0
          %279 = vst [vmem:[#allocation2 + $0x30] sm:$0xff] 0.0
          %280 = vst [vmem:[#allocation2 + $0x38] sm:$0xff] 0.0
          %281 = vst [vmem:[#allocation2 + $0x40] sm:$0xff] 0.0
          %282 = vst [vmem:[#allocation2 + $0x48] sm:$0xff] 0.0
          %283 = vst [vmem:[#allocation2 + $0x50] sm:$0xff] 0.0
          %284 = vst [vmem:[#allocation2 + $0x58] sm:$0xff] 0.0
          %285 = vst [vmem:[#allocation2 + $0x60] sm:$0xff] 0.0
          %286 = vst [vmem:[#allocation2 + $0x68] sm:$0xff] 0.0
          %287 = vst [vmem:[#allocation2 + $0x70] sm:$0xff] 0.0
          %288 = vst [vmem:[#allocation2 + $0x78] sm:$0xff] 0.0
          %289 = vst [vmem:[#allocation2 + $0x80] sm:$0xff] 0.0
          %290 = vst [vmem:[#allocation2 + $0x88] sm:$0xff] 0.0
          %291 = vst [vmem:[#allocation2 + $0x90] sm:$0xff] 0.0
          %292 = vst [vmem:[#allocation2 + $0x98] sm:$0xff] 0.0
          %293 = vst [vmem:[#allocation2 + $0xa0] sm:$0xff] 0.0
          %294 = vst [vmem:[#allocation2 + $0xa8] sm:$0xff] 0.0
          %295 = vst [vmem:[#allocation2 + $0xb0] sm:$0xff] 0.0
          %296 = vst [vmem:[#allocation2 + $0xb8] sm:$0xff] 0.0
          %297 = vst [vmem:[#allocation2 + $0xc0] sm:$0xff] 0.0
          %298 = vst [vmem:[#allocation2 + $0xc8] sm:$0xff] 0.0
          %299 = vst [vmem:[#allocation2 + $0xd0] sm:$0xff] 0.0
          %300 = vst [vmem:[#allocation2 + $0xd8] sm:$0xff] 0.0
          %301 = vst [vmem:[#allocation2 + $0xe0] sm:$0xff] 0.0
          %302 = vst [vmem:[#allocation2 + $0xe8] sm:$0xff] 0.0
          %303 = vst [vmem:[#allocation2 + $0xf0] sm:$0xff] 0.0
          %304 = vst [vmem:[#allocation2 + $0xf8] sm:$0xff] 0.0
          %305 = vst [vmem:[#allocation2 + $0x100] sm:$0xff] 0.0
          %306 = vst [vmem:[#allocation2 + $0x108] sm:$0xff] 0.0
          %307 = vst [vmem:[#allocation2 + $0x110] sm:$0xff] 0.0
          %308 = vst [vmem:[#allocation2 + $0x118] sm:$0xff] 0.0
          %309 = vst [vmem:[#allocation2 + $0x120] sm:$0xff] 0.0
          %310 = vst [vmem:[#allocation2 + $0x128] sm:$0xff] 0.0
          %311 = vst [vmem:[#allocation2 + $0x130] sm:$0xff] 0.0
          %312 = vst [vmem:[#allocation2 + $0x138] sm:$0xff] 0.0
          %313 = vst [vmem:[#allocation2 + $0x140] sm:$0xff] 0.0
          %314 = vst [vmem:[#allocation2 + $0x148] sm:$0xff] 0.0
          %315 = vst [vmem:[#allocation2 + $0x150] sm:$0xff] 0.0
          %316 = vst [vmem:[#allocation2 + $0x158] sm:$0xff] 0.0
          %317 = vst [vmem:[#allocation2 + $0x160] sm:$0xff] 0.0
          %318 = vst [vmem:[#allocation2 + $0x168] sm:$0xff] 0.0
          %319 = vst [vmem:[#allocation2 + $0x170] sm:$0xff] 0.0
          %320 = vst [vmem:[#allocation2 + $0x178] sm:$0xff] 0.0
          %321 = vst [vmem:[#allocation2 + $0x180] sm:$0xff] 0.0
          %322 = vst [vmem:[#allocation2 + $0x188] sm:$0xff] 0.0
          %323 = vst [vmem:[#allocation2 + $0x190] sm:$0xff] 0.0
          %324 = vst [vmem:[#allocation2 + $0x198] sm:$0xff] 0.0
          %325 = vst [vmem:[#allocation2 + $0x1a0] sm:$0xff] 0.0
          %326 = vst [vmem:[#allocation2 + $0x1a8] sm:$0xff] 0.0
          %327 = vst [vmem:[#allocation2 + $0x1b0] sm:$0xff] 0.0
          %328 = vst [vmem:[#allocation2 + $0x1b8] sm:$0xff] 0.0
          %329 = vst [vmem:[#allocation2 + $0x1c0] sm:$0xff] 0.0
          %330 = vst [vmem:[#allocation2 + $0x1c8] sm:$0xff] 0.0
          %331 = vst [vmem:[#allocation2 + $0x1d0] sm:$0xff] 0.0
          %332 = vst [vmem:[#allocation2 + $0x1d8] sm:$0xff] 0.0
          %333 = vst [vmem:[#allocation2 + $0x1e0] sm:$0xff] 0.0
          %334 = vst [vmem:[#allocation2 + $0x1e8] sm:$0xff] 0.0
          %335 = vst [vmem:[#allocation2 + $0x1f0] sm:$0xff] 0.0
          %336 = vst [vmem:[#allocation2 + $0x1f8] sm:$0xff] 0.0
          %337 = vst [vmem:[#allocation2 + $0x200] sm:$0xff] 0.0
          %338 = vst [vmem:[#allocation2 + $0x208] sm:$0xff] 0.0
          %339 = vst [vmem:[#allocation2 + $0x210] sm:$0xff] 0.0
          %340 = vst [vmem:[#allocation2 + $0x218] sm:$0xff] 0.0
          %341 = vst [vmem:[#allocation2 + $0x220] sm:$0xff] 0.0
          %342 = vst [vmem:[#allocation2 + $0x228] sm:$0xff] 0.0
          %343 = vst [vmem:[#allocation2 + $0x230] sm:$0xff] 0.0
          %344 = vst [vmem:[#allocation2 + $0x238] sm:$0xff] 0.0
          %345 = vst [vmem:[#allocation2 + $0x240] sm:$0xff] 0.0
          %346 = vst [vmem:[#allocation2 + $0x248] sm:$0xff] 0.0
          %347 = vst [vmem:[#allocation2 + $0x250] sm:$0xff] 0.0
          %348 = vst [vmem:[#allocation2 + $0x258] sm:$0xff] 0.0
          %349 = vst [vmem:[#allocation2 + $0x260] sm:$0xff] 0.0
          %350 = vst [vmem:[#allocation2 + $0x268] sm:$0xff] 0.0
          %351 = vst [vmem:[#allocation2 + $0x270] sm:$0xff] 0.0
          %352 = vst [vmem:[#allocation2 + $0x278] sm:$0xff] 0.0
          %353 = vst [vmem:[#allocation2 + $0x280] sm:$0xff] 0.0
          %354 = vst [vmem:[#allocation2 + $0x288] sm:$0xff] 0.0
          %355 = vst [vmem:[#allocation2 + $0x290] sm:$0xff] 0.0
          %356 = vst [vmem:[#allocation2 + $0x298] sm:$0xff] 0.0
          %357 = vst [vmem:[#allocation2 + $0x2a0] sm:$0xff] 0.0
          %358 = vst [vmem:[#allocation2 + $0x2a8] sm:$0xff] 0.0
          %359 = vst [vmem:[#allocation2 + $0x2b0] sm:$0xff] 0.0
          %360 = vst [vmem:[#allocation2 + $0x2b8] sm:$0xff] 0.0
          %361 = vst [vmem:[#allocation2 + $0x2c0] sm:$0xff] 0.0
          %362 = vst [vmem:[#allocation2 + $0x2c8] sm:$0xff] 0.0
          %363 = vst [vmem:[#allocation2 + $0x2d0] sm:$0xff] 0.0
          %364 = vst [vmem:[#allocation2 + $0x2d8] sm:$0xff] 0.0
          %365 = vst [vmem:[#allocation2 + $0x2e0] sm:$0xff] 0.0
          %366 = vst [vmem:[#allocation2 + $0x2e8] sm:$0xff] 0.0
          %367 = vst [vmem:[#allocation2 + $0x2f0] sm:$0xff] 0.0
          %368 = vst [vmem:[#allocation2 + $0x2f8] sm:$0xff] 0.0
        $region44: #{tpu_custom_call.1} parent=31 // pred_fallthru
          _
        %v369 = vld [vmem:[#allocation2] sm:$0xff]
        %v370 = vld [vmem:[#allocation2 + $0x8] sm:$0xff]
        %v371 = vld [vmem:[#allocation2 + $0x10] sm:$0xff]
        %v372 = vld [vmem:[#allocation2 + $0x18] sm:$0xff]
        %v373 = vld [vmem:[#allocation2 + $0x20] sm:$0xff]
        %v374 = vld [vmem:[#allocation2 + $0x28] sm:$0xff]
        %v375 = vld [vmem:[#allocation2 + $0x30] sm:$0xff]
        %v376 = vld [vmem:[#allocation2 + $0x38] sm:$0xff]
        %v377 = vld [vmem:[#allocation2 + $0x40] sm:$0xff]
        %v378 = vld [vmem:[#allocation2 + $0x48] sm:$0xff]
        %v379 = vld [vmem:[#allocation2 + $0x50] sm:$0xff]
        %v380 = vld [vmem:[#allocation2 + $0x58] sm:$0xff]
        %v381 = vld [vmem:[#allocation2 + $0x60] sm:$0xff]
        %v382 = vld [vmem:[#allocation2 + $0x68] sm:$0xff]
        %v383 = vld [vmem:[#allocation2 + $0x70] sm:$0xff]
        %v384 = vld [vmem:[#allocation2 + $0x78] sm:$0xff]
        %v385 = vld [vmem:[#allocation2 + $0x80] sm:$0xff]
        %v386 = vld [vmem:[#allocation2 + $0x88] sm:$0xff]
        %v387 = vld [vmem:[#allocation2 + $0x90] sm:$0xff]
        %v388 = vld [vmem:[#allocation2 + $0x98] sm:$0xff]
        %v389 = vld [vmem:[#allocation2 + $0xa0] sm:$0xff]
        %v390 = vld [vmem:[#allocation2 + $0xa8] sm:$0xff]
        %v391 = vld [vmem:[#allocation2 + $0xb0] sm:$0xff]
        %v392 = vld [vmem:[#allocation2 + $0xb8] sm:$0xff]
        %v393 = vld [vmem:[#allocation2 + $0xc0] sm:$0xff]
        %v394 = vld [vmem:[#allocation2 + $0xc8] sm:$0xff]
        %v395 = vld [vmem:[#allocation2 + $0xd0] sm:$0xff]
        %v396 = vld [vmem:[#allocation2 + $0xd8] sm:$0xff]
        %v397 = vld [vmem:[#allocation2 + $0xe0] sm:$0xff]
        %v398 = vld [vmem:[#allocation2 + $0xe8] sm:$0xff]
        %v399 = vld [vmem:[#allocation2 + $0xf0] sm:$0xff]
        %v400 = vld [vmem:[#allocation2 + $0xf8] sm:$0xff]
        %v401 = vld [vmem:[#allocation2 + $0x100] sm:$0xff]
        %v402 = vld [vmem:[#allocation2 + $0x108] sm:$0xff]
        %v403 = vld [vmem:[#allocation2 + $0x110] sm:$0xff]
        %v404 = vld [vmem:[#allocation2 + $0x118] sm:$0xff]
        %v405 = vld [vmem:[#allocation2 + $0x120] sm:$0xff]
        %v406 = vld [vmem:[#allocation2 + $0x128] sm:$0xff]
        %v407 = vld [vmem:[#allocation2 + $0x130] sm:$0xff]
        %v408 = vld [vmem:[#allocation2 + $0x138] sm:$0xff]
        %v409 = vld [vmem:[#allocation2 + $0x140] sm:$0xff]
        %v410 = vld [vmem:[#allocation2 + $0x148] sm:$0xff]
        %v411 = vld [vmem:[#allocation2 + $0x150] sm:$0xff]
        %v412 = vld [vmem:[#allocation2 + $0x158] sm:$0xff]
        %v413 = vld [vmem:[#allocation2 + $0x160] sm:$0xff]
        %v414 = vld [vmem:[#allocation2 + $0x168] sm:$0xff]
        %v415 = vld [vmem:[#allocation2 + $0x170] sm:$0xff]
        %v416 = vld [vmem:[#allocation2 + $0x178] sm:$0xff]
        %v417 = vld [vmem:[#allocation2 + $0x180] sm:$0xff]
        %v418 = vld [vmem:[#allocation2 + $0x188] sm:$0xff]
        %v419 = vld [vmem:[#allocation2 + $0x190] sm:$0xff]
        %v420 = vld [vmem:[#allocation2 + $0x198] sm:$0xff]
        %v421 = vld [vmem:[#allocation2 + $0x1a0] sm:$0xff]
        %v422 = vld [vmem:[#allocation2 + $0x1a8] sm:$0xff]
        %v423 = vld [vmem:[#allocation2 + $0x1b0] sm:$0xff]
        %v424 = vld [vmem:[#allocation2 + $0x1b8] sm:$0xff]
        %v425 = vld [vmem:[#allocation2 + $0x1c0] sm:$0xff]
        %v426 = vld [vmem:[#allocation2 + $0x1c8] sm:$0xff]
        %v427 = vld [vmem:[#allocation2 + $0x1d0] sm:$0xff]
        %v428 = vld [vmem:[#allocation2 + $0x1d8] sm:$0xff]
        %v429 = vld [vmem:[#allocation2 + $0x1e0] sm:$0xff]
        %v430 = vld [vmem:[#allocation2 + $0x1e8] sm:$0xff]
        %v431 = vld [vmem:[#allocation2 + $0x1f0] sm:$0xff]
        %v432 = vld [vmem:[#allocation2 + $0x1f8] sm:$0xff]
        %v433 = vld [vmem:[#allocation2 + $0x200] sm:$0xff]
        %v434 = vld [vmem:[#allocation2 + $0x208] sm:$0xff]
        %v435 = vld [vmem:[#allocation2 + $0x210] sm:$0xff]
        %v436 = vld [vmem:[#allocation2 + $0x218] sm:$0xff]
        %v437 = vld [vmem:[#allocation2 + $0x220] sm:$0xff]
        %v438 = vld [vmem:[#allocation2 + $0x228] sm:$0xff]
        %v439 = vld [vmem:[#allocation2 + $0x230] sm:$0xff]
        %v440 = vld [vmem:[#allocation2 + $0x238] sm:$0xff]
        %v441 = vld [vmem:[#allocation2 + $0x240] sm:$0xff]
        %v442 = vld [vmem:[#allocation2 + $0x248] sm:$0xff]
        %v443 = vld [vmem:[#allocation2 + $0x250] sm:$0xff]
        %v444 = vld [vmem:[#allocation2 + $0x258] sm:$0xff]
        %v445 = vld [vmem:[#allocation2 + $0x260] sm:$0xff]
        %v446 = vld [vmem:[#allocation2 + $0x268] sm:$0xff]
        %v447 = vld [vmem:[#allocation2 + $0x270] sm:$0xff]
        %v448 = vld [vmem:[#allocation2 + $0x278] sm:$0xff]
        %v449 = vld [vmem:[#allocation2 + $0x280] sm:$0xff]
        %v450 = vld [vmem:[#allocation2 + $0x288] sm:$0xff]
        %v451 = vld [vmem:[#allocation2 + $0x290] sm:$0xff]
        %v452 = vld [vmem:[#allocation2 + $0x298] sm:$0xff]
        %v453 = vld [vmem:[#allocation2 + $0x2a0] sm:$0xff]
        %v454 = vld [vmem:[#allocation2 + $0x2a8] sm:$0xff]
        %v455 = vld [vmem:[#allocation2 + $0x2b0] sm:$0xff]
        %v456 = vld [vmem:[#allocation2 + $0x2b8] sm:$0xff]
        %v457 = vld [vmem:[#allocation2 + $0x2c0] sm:$0xff]
        %v458 = vld [vmem:[#allocation2 + $0x2c8] sm:$0xff]
        %v459 = vld [vmem:[#allocation2 + $0x2d0] sm:$0xff]
        %v460 = vld [vmem:[#allocation2 + $0x2d8] sm:$0xff]
        %v461 = vld [vmem:[#allocation2 + $0x2e0] sm:$0xff]
        %v462 = vld [vmem:[#allocation2 + $0x2e8] sm:$0xff]
        %v463 = vld [vmem:[#allocation2 + $0x2f0] sm:$0xff]
        %v464 = vld [vmem:[#allocation2 + $0x2f8] sm:$0xff]
        %v465 = vld [vmem:[#allocation3] sm:$0xff]
        %v466 = vld [vmem:[#allocation3 + $0x8] sm:$0xff]
        %v467 = vld [vmem:[#allocation3 + $0x10] sm:$0xff]
        %v468 = vld [vmem:[#allocation3 + $0x18] sm:$0xff]
        %v469 = vld [vmem:[#allocation3 + $0x20] sm:$0xff]
        %v470 = vld [vmem:[#allocation3 + $0x28] sm:$0xff]
        %v471 = vld [vmem:[#allocation3 + $0x30] sm:$0xff]
        %v472 = vld [vmem:[#allocation3 + $0x38] sm:$0xff]
        %v473 = vld [vmem:[#allocation3 + $0x40] sm:$0xff]
        %v474 = vld [vmem:[#allocation3 + $0x48] sm:$0xff]
        %v475 = vld [vmem:[#allocation3 + $0x50] sm:$0xff]
        %v476 = vld [vmem:[#allocation3 + $0x58] sm:$0xff]
        %v477 = vld [vmem:[#allocation3 + $0x60] sm:$0xff]
        %v478 = vld [vmem:[#allocation3 + $0x68] sm:$0xff]
        %v479 = vld [vmem:[#allocation3 + $0x70] sm:$0xff]
        %v480 = vld [vmem:[#allocation3 + $0x78] sm:$0xff]
        %v481 = vld [vmem:[#allocation3 + $0x80] sm:$0xff]
        %v482 = vld [vmem:[#allocation3 + $0x88] sm:$0xff]
        %v483 = vld [vmem:[#allocation3 + $0x90] sm:$0xff]
        %v484 = vld [vmem:[#allocation3 + $0x98] sm:$0xff]
        %v485 = vld [vmem:[#allocation3 + $0xa0] sm:$0xff]
        %v486 = vld [vmem:[#allocation3 + $0xa8] sm:$0xff]
        %v487 = vld [vmem:[#allocation3 + $0xb0] sm:$0xff]
        %v488 = vld [vmem:[#allocation3 + $0xb8] sm:$0xff]
        %v489 = vld [vmem:[#allocation3 + $0xc0] sm:$0xff]
        %v490 = vld [vmem:[#allocation3 + $0xc8] sm:$0xff]
        %v491 = vld [vmem:[#allocation3 + $0xd0] sm:$0xff]
        %v492 = vld [vmem:[#allocation3 + $0xd8] sm:$0xff]
        %v493 = vld [vmem:[#allocation3 + $0xe0] sm:$0xff]
        %v494 = vld [vmem:[#allocation3 + $0xe8] sm:$0xff]
        %v495 = vld [vmem:[#allocation3 + $0xf0] sm:$0xff]
        %v496 = vld [vmem:[#allocation3 + $0xf8] sm:$0xff]
        %v497 = vld [vmem:[#allocation3 + $0x100] sm:$0xff]
        %v498 = vld [vmem:[#allocation3 + $0x108] sm:$0xff]
        %v499 = vld [vmem:[#allocation3 + $0x110] sm:$0xff]
        %v500 = vld [vmem:[#allocation3 + $0x118] sm:$0xff]
        %v501 = vld [vmem:[#allocation3 + $0x120] sm:$0xff]
        %v502 = vld [vmem:[#allocation3 + $0x128] sm:$0xff]
        %v503 = vld [vmem:[#allocation3 + $0x130] sm:$0xff]
        %v504 = vld [vmem:[#allocation3 + $0x138] sm:$0xff]
        %v505 = vld [vmem:[#allocation3 + $0x140] sm:$0xff]
        %v506 = vld [vmem:[#allocation3 + $0x148] sm:$0xff]
        %v507 = vld [vmem:[#allocation3 + $0x150] sm:$0xff]
        %v508 = vld [vmem:[#allocation3 + $0x158] sm:$0xff]
        %v509 = vld [vmem:[#allocation3 + $0x160] sm:$0xff]
        %v510 = vld [vmem:[#allocation3 + $0x168] sm:$0xff]
        %v511 = vld [vmem:[#allocation3 + $0x170] sm:$0xff]
        %v512 = vld [vmem:[#allocation3 + $0x178] sm:$0xff]
        %v513 = vld [vmem:[#allocation3 + $0x180] sm:$0xff]
        %v514 = vld [vmem:[#allocation3 + $0x188] sm:$0xff]
        %v515 = vld [vmem:[#allocation3 + $0x190] sm:$0xff]
        %v516 = vld [vmem:[#allocation3 + $0x198] sm:$0xff]
        %v517 = vld [vmem:[#allocation3 + $0x1a0] sm:$0xff]
        %v518 = vld [vmem:[#allocation3 + $0x1a8] sm:$0xff]
        %v519 = vld [vmem:[#allocation3 + $0x1b0] sm:$0xff]
        %v520 = vld [vmem:[#allocation3 + $0x1b8] sm:$0xff]
        %v521 = vld [vmem:[#allocation3 + $0x1c0] sm:$0xff]
        %v522 = vld [vmem:[#allocation3 + $0x1c8] sm:$0xff]
        %v523 = vld [vmem:[#allocation3 + $0x1d0] sm:$0xff]
        %v524 = vld [vmem:[#allocation3 + $0x1d8] sm:$0xff]
        %v525 = vld [vmem:[#allocation3 + $0x1e0] sm:$0xff]
        %v526 = vld [vmem:[#allocation3 + $0x1e8] sm:$0xff]
        %v527 = vld [vmem:[#allocation3 + $0x1f0] sm:$0xff]
        %v528 = vld [vmem:[#allocation3 + $0x1f8] sm:$0xff]
        %v529 = vpack.c.bf16 %v467, %v465
        %v530 = vpack.c.bf16 %v468, %v466
        %v531 = vpack.c.bf16 %v471, %v469
        %v532 = vpack.c.bf16 %v472, %v470
        %v533 = vpack.c.bf16 %v475, %v473
        %v534 = vpack.c.bf16 %v476, %v474
        %v535 = vpack.c.bf16 %v479, %v477
        %v536 = vpack.c.bf16 %v480, %v478
        %v537 = vpack.c.bf16 %v483, %v481
        %v538 = vpack.c.bf16 %v484, %v482
        %v539 = vpack.c.bf16 %v487, %v485
        %v540 = vpack.c.bf16 %v488, %v486
        %v541 = vpack.c.bf16 %v491, %v489
        %v542 = vpack.c.bf16 %v492, %v490
        %v543 = vpack.c.bf16 %v495, %v493
        %v544 = vpack.c.bf16 %v496, %v494
        %v545 = vpack.c.bf16 %v499, %v497
        %v546 = vpack.c.bf16 %v500, %v498
        %v547 = vpack.c.bf16 %v503, %v501
        %v548 = vpack.c.bf16 %v504, %v502
        %v549 = vpack.c.bf16 %v507, %v505
        %v550 = vpack.c.bf16 %v508, %v506
        %v551 = vpack.c.bf16 %v511, %v509
        %v552 = vpack.c.bf16 %v512, %v510
        %v553 = vpack.c.bf16 %v515, %v513
        %v554 = vpack.c.bf16 %v516, %v514
        %v555 = vpack.c.bf16 %v519, %v517
        %v556 = vpack.c.bf16 %v520, %v518
        %v557 = vpack.c.bf16 %v523, %v521
        %v558 = vpack.c.bf16 %v524, %v522
        %v559 = vpack.c.bf16 %v527, %v525
        %v560 = vpack.c.bf16 %v528, %v526
        %v561 = vld [vmem:[%s230] sm:$0xff]
        %v562 = vld [vmem:[%s230 + $0x8] sm:$0xf]
        %v563 = vld [vmem:[%s230 + $0xc] sm:$0xff]
        %v564 = vld [vmem:[%s230 + $0x14] sm:$0xf]
        %v565 = vld [vmem:[%s230 + $0x18] sm:$0xff]
        %v566 = vld [vmem:[%s230 + $0x20] sm:$0xf]
        %v567 = vld [vmem:[%s230 + $0x24] sm:$0xff]
        %v568 = vld [vmem:[%s230 + $0x2c] sm:$0xf]
        %v569 = vld [vmem:[%s230 + $0x30] sm:$0xff]
        %v570 = vld [vmem:[%s230 + $0x38] sm:$0xf]
        %v571 = vld [vmem:[%s230 + $0x3c] sm:$0xff]
        %v572 = vld [vmem:[%s230 + $0x44] sm:$0xf]
        %v573 = vld [vmem:[%s230 + $0x48] sm:$0xff]
        %v574 = vld [vmem:[%s230 + $0x50] sm:$0xf]
        %v575 = vld [vmem:[%s230 + $0x54] sm:$0xff]
        %v576 = vld [vmem:[%s230 + $0x5c] sm:$0xf]
        %v577 = vld [vmem:[%s230 + $0x60] sm:$0xff]
        %v578 = vld [vmem:[%s230 + $0x68] sm:$0xf]
        %v579 = vld [vmem:[%s230 + $0x6c] sm:$0xff]
        %v580 = vld [vmem:[%s230 + $0x74] sm:$0xf]
        %v581 = vld [vmem:[%s230 + $0x78] sm:$0xff]
        %v582 = vld [vmem:[%s230 + $0x80] sm:$0xf]
        %v583 = vld [vmem:[%s230 + $0x84] sm:$0xff]
        %v584 = vld [vmem:[%s230 + $0x8c] sm:$0xf]
        %v585 = vld [vmem:[%s230 + $0x90] sm:$0xff]
        %v586 = vld [vmem:[%s230 + $0x98] sm:$0xf]
        %v587 = vld [vmem:[%s230 + $0x9c] sm:$0xff]
        %v588 = vld [vmem:[%s230 + $0xa4] sm:$0xf]
        %v589 = vld [vmem:[%s230 + $0xa8] sm:$0xff]
        %v590 = vld [vmem:[%s230 + $0xb0] sm:$0xf]
        %v591 = vld [vmem:[%s230 + $0xb4] sm:$0xff]
        %v592 = vld [vmem:[%s230 + $0xbc] sm:$0xf]
        %v593 = vld [vmem:[%s230 + $0xc0] sm:$0xff]
        %v594 = vld [vmem:[%s230 + $0xc8] sm:$0xf]
        %v595 = vld [vmem:[%s230 + $0xcc] sm:$0xff]
        %v596 = vld [vmem:[%s230 + $0xd4] sm:$0xf]
        %v597 = vld [vmem:[%s230 + $0xd8] sm:$0xff]
        %v598 = vld [vmem:[%s230 + $0xe0] sm:$0xf]
        %v599 = vld [vmem:[%s230 + $0xe4] sm:$0xff]
        %v600 = vld [vmem:[%s230 + $0xec] sm:$0xf]
        %v601 = vld [vmem:[%s230 + $0xf0] sm:$0xff]
        %v602 = vld [vmem:[%s230 + $0xf8] sm:$0xf]
        %v603 = vld [vmem:[%s230 + $0xfc] sm:$0xff]
        %v604 = vld [vmem:[%s230 + $0x104] sm:$0xf]
        %v605 = vld [vmem:[%s230 + $0x108] sm:$0xff]
        %v606 = vld [vmem:[%s230 + $0x110] sm:$0xf]
        %v607 = vld [vmem:[%s230 + $0x114] sm:$0xff]
        %v608 = vld [vmem:[%s230 + $0x11c] sm:$0xf]
        %v609 = vld [vmem:[%s230 + $0x120] sm:$0xff]
        %v610 = vld [vmem:[%s230 + $0x128] sm:$0xf]
        %v611 = vld [vmem:[%s230 + $0x12c] sm:$0xff]
        %v612 = vld [vmem:[%s230 + $0x134] sm:$0xf]
        %v613 = vld [vmem:[%s230 + $0x138] sm:$0xff]
        %v614 = vld [vmem:[%s230 + $0x140] sm:$0xf]
        %v615 = vld [vmem:[%s230 + $0x144] sm:$0xff]
        %v616 = vld [vmem:[%s230 + $0x14c] sm:$0xf]
        %v617 = vld [vmem:[%s230 + $0x150] sm:$0xff]
        %v618 = vld [vmem:[%s230 + $0x158] sm:$0xf]
        %v619 = vld [vmem:[%s230 + $0x15c] sm:$0xff]
        %v620 = vld [vmem:[%s230 + $0x164] sm:$0xf]
        %v621 = vld [vmem:[%s230 + $0x168] sm:$0xff]
        %v622 = vld [vmem:[%s230 + $0x170] sm:$0xf]
        %v623 = vld [vmem:[%s230 + $0x174] sm:$0xff]
        %v624 = vld [vmem:[%s230 + $0x17c] sm:$0xf]
        %v689 = vunpack.c.l.b16 %v561
        %v690 = vunpack.c.h.b16 %v561
        %v691 = vunpack.c.l.b16 %v562
        %v692 = vunpack.c.l.b16 %v563
        %v693 = vunpack.c.h.b16 %v563
        %v694 = vunpack.c.l.b16 %v564
        %v695 = vunpack.c.l.b16 %v565
        %v696 = vunpack.c.h.b16 %v565
        %v697 = vunpack.c.l.b16 %v566
        %v698 = vunpack.c.l.b16 %v567
        %v699 = vunpack.c.h.b16 %v567
        %v700 = vunpack.c.l.b16 %v568
        %v701 = vunpack.c.l.b16 %v569
        %v702 = vunpack.c.h.b16 %v569
        %v703 = vunpack.c.l.b16 %v570
        %v704 = vunpack.c.l.b16 %v571
        %v705 = vunpack.c.h.b16 %v571
        %v706 = vunpack.c.l.b16 %v572
        %v707 = vunpack.c.l.b16 %v573
        %v708 = vunpack.c.h.b16 %v573
        %v709 = vunpack.c.l.b16 %v574
        %v710 = vunpack.c.l.b16 %v575
        %v711 = vunpack.c.h.b16 %v575
        %v712 = vunpack.c.l.b16 %v576
        %v713 = vunpack.c.l.b16 %v577
        %v714 = vunpack.c.h.b16 %v577
        %v715 = vunpack.c.l.b16 %v578
        %v716 = vunpack.c.l.b16 %v579
        %v717 = vunpack.c.h.b16 %v579
        %v718 = vunpack.c.l.b16 %v580
        %v719 = vunpack.c.l.b16 %v581
        %v720 = vunpack.c.h.b16 %v581
        %v721 = vunpack.c.l.b16 %v582
        %v722 = vunpack.c.l.b16 %v583
        %v723 = vunpack.c.h.b16 %v583
        %v724 = vunpack.c.l.b16 %v584
        %v725 = vunpack.c.l.b16 %v585
        %v726 = vunpack.c.h.b16 %v585
        %v727 = vunpack.c.l.b16 %v586
        %v728 = vunpack.c.l.b16 %v587
        %v729 = vunpack.c.h.b16 %v587
        %v730 = vunpack.c.l.b16 %v588
        %v731 = vunpack.c.l.b16 %v589
        %v732 = vunpack.c.h.b16 %v589
        %v733 = vunpack.c.l.b16 %v590
        %v734 = vunpack.c.l.b16 %v591
        %v735 = vunpack.c.h.b16 %v591
        %v736 = vunpack.c.l.b16 %v592
        %v737 = vunpack.c.l.b16 %v593
        %v738 = vunpack.c.h.b16 %v593
        %v739 = vunpack.c.l.b16 %v594
        %v740 = vunpack.c.l.b16 %v595
        %v741 = vunpack.c.h.b16 %v595
        %v742 = vunpack.c.l.b16 %v596
        %v743 = vunpack.c.l.b16 %v597
        %v744 = vunpack.c.h.b16 %v597
        %v745 = vunpack.c.l.b16 %v598
        %v746 = vunpack.c.l.b16 %v599
        %v747 = vunpack.c.h.b16 %v599
        %v748 = vunpack.c.l.b16 %v600
        %v749 = vunpack.c.l.b16 %v601
        %v750 = vunpack.c.h.b16 %v601
        %v751 = vunpack.c.l.b16 %v602
        %v752 = vunpack.c.l.b16 %v603
        %v753 = vunpack.c.h.b16 %v603
        %v754 = vunpack.c.l.b16 %v604
        %v755 = vunpack.c.l.b16 %v605
        %v756 = vunpack.c.h.b16 %v605
        %v757 = vunpack.c.l.b16 %v606
        %v758 = vunpack.c.l.b16 %v607
        %v759 = vunpack.c.h.b16 %v607
        %v760 = vunpack.c.l.b16 %v608
        %v761 = vunpack.c.l.b16 %v609
        %v762 = vunpack.c.h.b16 %v609
        %v763 = vunpack.c.l.b16 %v610
        %v764 = vunpack.c.l.b16 %v611
        %v765 = vunpack.c.h.b16 %v611
        %v766 = vunpack.c.l.b16 %v612
        %v767 = vunpack.c.l.b16 %v613
        %v768 = vunpack.c.h.b16 %v613
        %v769 = vunpack.c.l.b16 %v614
        %v770 = vunpack.c.l.b16 %v615
        %v771 = vunpack.c.h.b16 %v615
        %v772 = vunpack.c.l.b16 %v616
        %v773 = vunpack.c.l.b16 %v617
        %v774 = vunpack.c.h.b16 %v617
        %v775 = vunpack.c.l.b16 %v618
        %v776 = vunpack.c.l.b16 %v619
        %v777 = vunpack.c.h.b16 %v619
        %v778 = vunpack.c.l.b16 %v620
        %v779 = vunpack.c.l.b16 %v621
        %v780 = vunpack.c.h.b16 %v621
        %v781 = vunpack.c.l.b16 %v622
        %v782 = vunpack.c.l.b16 %v623
        %v783 = vunpack.c.h.b16 %v623
        %v784 = vunpack.c.l.b16 %v624
        %v785 = vpack.c.b16 %v692, %v689
        %v786 = vpack.c.b16 %v693, %v690
        %v787 = vpack.c.b16 %v694, %v691
        %v788 = vpack.c.b16 %v698, %v695
        %v789 = vpack.c.b16 %v699, %v696
        %v790 = vpack.c.b16 %v700, %v697
        %v791 = vpack.c.b16 %v704, %v701
        %v792 = vpack.c.b16 %v705, %v702
        %v793 = vpack.c.b16 %v706, %v703
        %v794 = vpack.c.b16 %v710, %v707
        %v795 = vpack.c.b16 %v711, %v708
        %v796 = vpack.c.b16 %v712, %v709
        %v797 = vpack.c.b16 %v716, %v713
        %v798 = vpack.c.b16 %v717, %v714
        %v799 = vpack.c.b16 %v718, %v715
        %v800 = vpack.c.b16 %v722, %v719
        %v801 = vpack.c.b16 %v723, %v720
        %v802 = vpack.c.b16 %v724, %v721
        %v803 = vpack.c.b16 %v728, %v725
        %v804 = vpack.c.b16 %v729, %v726
        %v805 = vpack.c.b16 %v730, %v727
        %v806 = vpack.c.b16 %v734, %v731
        %v807 = vpack.c.b16 %v735, %v732
        %v808 = vpack.c.b16 %v736, %v733
        %v809 = vpack.c.b16 %v740, %v737
        %v810 = vpack.c.b16 %v741, %v738
        %v811 = vpack.c.b16 %v742, %v739
        %v812 = vpack.c.b16 %v746, %v743
        %v813 = vpack.c.b16 %v747, %v744
        %v814 = vpack.c.b16 %v748, %v745
        %v815 = vpack.c.b16 %v752, %v749
        %v816 = vpack.c.b16 %v753, %v750
        %v817 = vpack.c.b16 %v754, %v751
        %v818 = vpack.c.b16 %v758, %v755
        %v819 = vpack.c.b16 %v759, %v756
        %v820 = vpack.c.b16 %v760, %v757
        %v821 = vpack.c.b16 %v764, %v761
        %v822 = vpack.c.b16 %v765, %v762
        %v823 = vpack.c.b16 %v766, %v763
        %v824 = vpack.c.b16 %v770, %v767
        %v825 = vpack.c.b16 %v771, %v768
        %v826 = vpack.c.b16 %v772, %v769
        %v827 = vpack.c.b16 %v776, %v773
        %v828 = vpack.c.b16 %v777, %v774
        %v829 = vpack.c.b16 %v778, %v775
        %v830 = vpack.c.b16 %v782, %v779
        %v831 = vpack.c.b16 %v783, %v780
        %v832 = vpack.c.b16 %v784, %v781
        %881 = vmatprep.subr.bf16.mxu0 %v786
        %882 = vmatpush1.bf16.msra.mxu0 %v785
        %883 = vmatprep.subr.bf16.mxu0 %v789
        %884 = vmatpush1.bf16.msra.mxu0 %v788
        %885 = vmatprep.subr.bf16.mxu0 %v792
        %886 = vmatpush1.bf16.msra.mxu0 %v791
        %887 = vmatprep.subr.bf16.mxu0 %v795
        %888 = vmatpush1.bf16.msra.mxu0 %v794
        %889 = vmatprep.subr.bf16.mxu0 %v798
        %890 = vmatpush1.bf16.msra.mxu0 %v797
        %891 = vmatprep.subr.bf16.mxu0 %v801
        %892 = vmatpush1.bf16.msra.mxu0 %v800
        %893 = vmatprep.subr.bf16.mxu0 %v804
        %894 = vmatpush1.bf16.msra.mxu0 %v803
        %895 = vmatprep.subr.bf16.mxu0 %v807
        %896 = vmatpush1.bf16.msra.mxu0 %v806
        %897 = vmatprep.subr.bf16.mxu0 %v810
        %898 = vmatpush1.bf16.msra.mxu0 %v809
        %899 = vmatprep.subr.bf16.mxu0 %v813
        %900 = vmatpush1.bf16.msra.mxu0 %v812
        %901 = vmatprep.subr.bf16.mxu0 %v816
        %902 = vmatpush1.bf16.msra.mxu0 %v815
        %903 = vmatprep.subr.bf16.mxu0 %v819
        %904 = vmatpush1.bf16.msra.mxu0 %v818
        %905 = vmatprep.subr.bf16.mxu0 %v822
        %906 = vmatpush1.bf16.msra.mxu0 %v821
        %907 = vmatprep.subr.bf16.mxu0 %v825
        %908 = vmatpush1.bf16.msra.mxu0 %v824
        %909 = vmatprep.subr.bf16.mxu0 %v828
        %910 = vmatpush1.bf16.msra.mxu0 %v827
        %911 = vmatprep.subr.bf16.mxu0 %v831
        %912 = vmatpush1.bf16.msra.mxu0 %v830
        %913 = vmatprep.mubr.bf16.mxu0 %v530
        %914 = vmatmul.mubr.bf16.gmra.mrb[0].mxu0 %v529
        %v915 = vpop.f32.mrb[0].mxu0
        %v916 = vadd.f32 0.0, %v915
        %v917 = vpop.f32.mrb[0].mxu0
        %v918 = vadd.f32 0.0, %v917
        %v919 = vpop.f32.mrb[0].mxu0
        %v920 = vadd.f32 0.0, %v919
        %v921 = vpop.f32.mrb[0].mxu0
        %v922 = vadd.f32 0.0, %v921
        %923 = vmatprep.mubr.bf16.mxu0 %v532
        %924 = vmatmul.mubr.bf16.gmra.mrb[0].mxu0 %v531
        %v925 = vpop.f32.mrb[0].mxu0
        %v926 = vadd.f32 0.0, %v925
        %v927 = vpop.f32.mrb[0].mxu0
        %v928 = vadd.f32 0.0, %v927
        %v929 = vpop.f32.mrb[0].mxu0
        %v930 = vadd.f32 0.0, %v929
        %v931 = vpop.f32.mrb[0].mxu0
        %v932 = vadd.f32 0.0, %v931
        %933 = vmatprep.mubr.bf16.mxu0 %v534
        %934 = vmatmul.mubr.bf16.gmra.mrb[0].mxu0 %v533
        %v935 = vpop.f32.mrb[0].mxu0
        %v936 = vadd.f32 0.0, %v935
        %v937 = vpop.f32.mrb[0].mxu0
        %v938 = vadd.f32 0.0, %v937
        %v939 = vpop.f32.mrb[0].mxu0
        %v940 = vadd.f32 0.0, %v939
        %v941 = vpop.f32.mrb[0].mxu0
        %v942 = vadd.f32 0.0, %v941
        %943 = vmatprep.mubr.bf16.mxu0 %v536
        %944 = vmatmul.mubr.bf16.gmra.mrb[0].mxu0 %v535
        %v945 = vpop.f32.mrb[0].mxu0
        %v946 = vadd.f32 0.0, %v945
        %v947 = vpop.f32.mrb[0].mxu0
        %v948 = vadd.f32 0.0, %v947
        %v949 = vpop.f32.mrb[0].mxu0
        %v950 = vadd.f32 0.0, %v949
        %v951 = vpop.f32.mrb[0].mxu0
        %v952 = vadd.f32 0.0, %v951
        %953 = vmatprep.mubr.bf16.mxu0 %v538
        %954 = vmatmul.mubr.bf16.gmra.mrb[0].mxu0 %v537
        %v955 = vpop.f32.mrb[0].mxu0
        %v956 = vadd.f32 0.0, %v955
        %v957 = vpop.f32.mrb[0].mxu0
        %v958 = vadd.f32 0.0, %v957
        %v959 = vpop.f32.mrb[0].mxu0
        %v960 = vadd.f32 0.0, %v959
        %v961 = vpop.f32.mrb[0].mxu0
        %v962 = vadd.f32 0.0, %v961
        %963 = vmatprep.mubr.bf16.mxu0 %v540
        %964 = vmatmul.mubr.bf16.gmra.mrb[0].mxu0 %v539
        %v965 = vpop.f32.mrb[0].mxu0
        %v966 = vadd.f32 0.0, %v965
        %v967 = vpop.f32.mrb[0].mxu0
        %v968 = vadd.f32 0.0, %v967
        %v969 = vpop.f32.mrb[0].mxu0
        %v970 = vadd.f32 0.0, %v969
        %v971 = vpop.f32.mrb[0].mxu0
        %v972 = vadd.f32 0.0, %v971
        %973 = vmatprep.mubr.bf16.mxu0 %v542
        %974 = vmatmul.mubr.bf16.gmra.mrb[0].mxu0 %v541
        %v975 = vpop.f32.mrb[0].mxu0
        %v976 = vadd.f32 0.0, %v975
        %v977 = vpop.f32.mrb[0].mxu0
        %v978 = vadd.f32 0.0, %v977
        %v979 = vpop.f32.mrb[0].mxu0
        %v980 = vadd.f32 0.0, %v979
        %v981 = vpop.f32.mrb[0].mxu0
        %v982 = vadd.f32 0.0, %v981
        %983 = vmatprep.mubr.bf16.mxu0 %v544
        %984 = vmatmul.mubr.bf16.gmra.mrb[0].mxu0 %v543
        %v985 = vpop.f32.mrb[0].mxu0
        %v986 = vadd.f32 0.0, %v985
        %v987 = vpop.f32.mrb[0].mxu0
        %v988 = vadd.f32 0.0, %v987
        %v989 = vpop.f32.mrb[0].mxu0
        %v990 = vadd.f32 0.0, %v989
        %v991 = vpop.f32.mrb[0].mxu0
        %v992 = vadd.f32 0.0, %v991
        %993 = vmatprep.mubr.bf16.mxu0 %v546
        %994 = vmatmul.mubr.bf16.gmra.mrb[0].mxu0 %v545
        %v995 = vpop.f32.mrb[0].mxu0
        %v996 = vadd.f32 0.0, %v995
        %v997 = vpop.f32.mrb[0].mxu0
        %v998 = vadd.f32 0.0, %v997
        %v999 = vpop.f32.mrb[0].mxu0
        %v1000 = vadd.f32 0.0, %v999
        %v1001 = vpop.f32.mrb[0].mxu0
        %v1002 = vadd.f32 0.0, %v1001
        %1003 = vmatprep.mubr.bf16.mxu0 %v548
        %1004 = vmatmul.mubr.bf16.gmra.mrb[0].mxu0 %v547
        %v1005 = vpop.f32.mrb[0].mxu0
        %v1006 = vadd.f32 0.0, %v1005
        %v1007 = vpop.f32.mrb[0].mxu0
        %v1008 = vadd.f32 0.0, %v1007
        %v1009 = vpop.f32.mrb[0].mxu0
        %v1010 = vadd.f32 0.0, %v1009
        %v1011 = vpop.f32.mrb[0].mxu0
        %v1012 = vadd.f32 0.0, %v1011
        %1013 = vmatprep.mubr.bf16.mxu0 %v550
        %1014 = vmatmul.mubr.bf16.gmra.mrb[0].mxu0 %v549
        %v1015 = vpop.f32.mrb[0].mxu0
        %v1016 = vadd.f32 0.0, %v1015
        %v1017 = vpop.f32.mrb[0].mxu0
        %v1018 = vadd.f32 0.0, %v1017
        %v1019 = vpop.f32.mrb[0].mxu0
        %v1020 = vadd.f32 0.0, %v1019
        %v1021 = vpop.f32.mrb[0].mxu0
        %v1022 = vadd.f32 0.0, %v1021
        %1023 = vmatprep.mubr.bf16.mxu0 %v552
        %1024 = vmatmul.mubr.bf16.gmra.mrb[0].mxu0 %v551
        %v1025 = vpop.f32.mrb[0].mxu0
        %v1026 = vadd.f32 0.0, %v1025
        %v1027 = vpop.f32.mrb[0].mxu0
        %v1028 = vadd.f32 0.0, %v1027
        %v1029 = vpop.f32.mrb[0].mxu0
        %v1030 = vadd.f32 0.0, %v1029
        %v1031 = vpop.f32.mrb[0].mxu0
        %v1032 = vadd.f32 0.0, %v1031
        %1033 = vmatprep.mubr.bf16.mxu0 %v554
        %1034 = vmatmul.mubr.bf16.gmra.mrb[0].mxu0 %v553
        %v1035 = vpop.f32.mrb[0].mxu0
        %v1036 = vadd.f32 0.0, %v1035
        %v1037 = vpop.f32.mrb[0].mxu0
        %v1038 = vadd.f32 0.0, %v1037
        %v1039 = vpop.f32.mrb[0].mxu0
        %v1040 = vadd.f32 0.0, %v1039
        %v1041 = vpop.f32.mrb[0].mxu0
        %v1042 = vadd.f32 0.0, %v1041
        %1043 = vmatprep.mubr.bf16.mxu0 %v556
        %1044 = vmatmul.mubr.bf16.gmra.mrb[0].mxu0 %v555
        %v1045 = vpop.f32.mrb[0].mxu0
        %v1046 = vadd.f32 0.0, %v1045
        %v1047 = vpop.f32.mrb[0].mxu0
        %v1048 = vadd.f32 0.0, %v1047
        %v1049 = vpop.f32.mrb[0].mxu0
        %v1050 = vadd.f32 0.0, %v1049
        %v1051 = vpop.f32.mrb[0].mxu0
        %v1052 = vadd.f32 0.0, %v1051
        %1053 = vmatprep.mubr.bf16.mxu0 %v558
        %1054 = vmatmul.mubr.bf16.gmra.mrb[0].mxu0 %v557
        %v1055 = vpop.f32.mrb[0].mxu0
        %v1056 = vadd.f32 0.0, %v1055
        %v1057 = vpop.f32.mrb[0].mxu0
        %v1058 = vadd.f32 0.0, %v1057
        %v1059 = vpop.f32.mrb[0].mxu0
        %v1060 = vadd.f32 0.0, %v1059
        %v1061 = vpop.f32.mrb[0].mxu0
        %v1062 = vadd.f32 0.0, %v1061
        %1063 = vmatprep.mubr.bf16.mxu0 %v560
        %1064 = vmatmul.mubr.bf16.gmra.mrb[0].mxu0 %v559
        %v1065 = vpop.f32.mrb[0].mxu0
        %v1066 = vadd.f32 0.0, %v1065
        %v1067 = vpop.f32.mrb[0].mxu0
        %v1068 = vadd.f32 0.0, %v1067
        %v1069 = vpop.f32.mrb[0].mxu0
        %v1070 = vadd.f32 0.0, %v1069
        %v1071 = vpop.f32.mrb[0].mxu0
        %v1072 = vadd.f32 0.0, %v1071
        %1073 = vdwg.mxu0
        %1074 = vmatprep.subr.bf16.mxu0 0
        %1075 = vmatpush1.bf16.msra.mxu0 %v787
        %1076 = vmatprep.subr.bf16.mxu0 0
        %1077 = vmatpush1.bf16.msra.mxu0 %v790
        %1078 = vmatprep.subr.bf16.mxu0 0
        %1079 = vmatpush1.bf16.msra.mxu0 %v793
        %1080 = vmatprep.subr.bf16.mxu0 0
        %1081 = vmatpush1.bf16.msra.mxu0 %v796
        %1082 = vmatprep.subr.bf16.mxu0 0
        %1083 = vmatpush1.bf16.msra.mxu0 %v799
        %1084 = vmatprep.subr.bf16.mxu0 0
        %1085 = vmatpush1.bf16.msra.mxu0 %v802
        %1086 = vmatprep.subr.bf16.mxu0 0
        %1087 = vmatpush1.bf16.msra.mxu0 %v805
        %1088 = vmatprep.subr.bf16.mxu0 0
        %1089 = vmatpush1.bf16.msra.mxu0 %v808
        %1090 = vmatprep.subr.bf16.mxu0 0
        %1091 = vmatpush1.bf16.msra.mxu0 %v811
        %1092 = vmatprep.subr.bf16.mxu0 0
        %1093 = vmatpush1.bf16.msra.mxu0 %v814
        %1094 = vmatprep.subr.bf16.mxu0 0
        %1095 = vmatpush1.bf16.msra.mxu0 %v817
        %1096 = vmatprep.subr.bf16.mxu0 0
        %1097 = vmatpush1.bf16.msra.mxu0 %v820
        %1098 = vmatprep.subr.bf16.mxu0 0
        %1099 = vmatpush1.bf16.msra.mxu0 %v823
        %1100 = vmatprep.subr.bf16.mxu0 0
        %1101 = vmatpush1.bf16.msra.mxu0 %v826
        %1102 = vmatprep.subr.bf16.mxu0 0
        %1103 = vmatpush1.bf16.msra.mxu0 %v829
        %1104 = vmatprep.subr.bf16.mxu0 0
        %1105 = vmatpush1.bf16.msra.mxu0 %v832
        %1106 = vmatprep.mubr.bf16.mxu0 %v530
        %1107 = vmatmul.mubr.bf16.gmra.mrb[0].mxu0 %v529
        %v1108 = vpop.f32.mrb[0].mxu0
        %v1109 = vadd.f32 0.0, %v1108
        %v1110 = vpop.f32.mrb[0].mxu0
        %v1111 = vpop.f32.mrb[0].mxu0
        %v1112 = vadd.f32 0.0, %v1111
        %v1113 = vpop.f32.mrb[0].mxu0
        %1114 = vmatprep.mubr.bf16.mxu0 %v532
        %1115 = vmatmul.mubr.bf16.gmra.mrb[0].mxu0 %v531
        %v1116 = vpop.f32.mrb[0].mxu0
        %v1117 = vadd.f32 0.0, %v1116
        %v1118 = vpop.f32.mrb[0].mxu0
        %v1119 = vpop.f32.mrb[0].mxu0
        %v1120 = vadd.f32 0.0, %v1119
        %v1121 = vpop.f32.mrb[0].mxu0
        %1122 = vmatprep.mubr.bf16.mxu0 %v534
        %1123 = vmatmul.mubr.bf16.gmra.mrb[0].mxu0 %v533
        %v1124 = vpop.f32.mrb[0].mxu0
        %v1125 = vadd.f32 0.0, %v1124
        %v1126 = vpop.f32.mrb[0].mxu0
        %v1127 = vpop.f32.mrb[0].mxu0
        %v1128 = vadd.f32 0.0, %v1127
        %v1129 = vpop.f32.mrb[0].mxu0
        %1130 = vmatprep.mubr.bf16.mxu0 %v536
        %1131 = vmatmul.mubr.bf16.gmra.mrb[0].mxu0 %v535
        %v1132 = vpop.f32.mrb[0].mxu0
        %v1133 = vadd.f32 0.0, %v1132
        %v1134 = vpop.f32.mrb[0].mxu0
        %v1135 = vpop.f32.mrb[0].mxu0
        %v1136 = vadd.f32 0.0, %v1135
        %v1137 = vpop.f32.mrb[0].mxu0
        %1138 = vmatprep.mubr.bf16.mxu0 %v538
        %1139 = vmatmul.mubr.bf16.gmra.mrb[0].mxu0 %v537
        %v1140 = vpop.f32.mrb[0].mxu0
        %v1141 = vadd.f32 0.0, %v1140
        %v1142 = vpop.f32.mrb[0].mxu0
        %v1143 = vpop.f32.mrb[0].mxu0
        %v1144 = vadd.f32 0.0, %v1143
        %v1145 = vpop.f32.mrb[0].mxu0
        %1146 = vmatprep.mubr.bf16.mxu0 %v540
        %1147 = vmatmul.mubr.bf16.gmra.mrb[0].mxu0 %v539
        %v1148 = vpop.f32.mrb[0].mxu0
        %v1149 = vadd.f32 0.0, %v1148
        %v1150 = vpop.f32.mrb[0].mxu0
        %v1151 = vpop.f32.mrb[0].mxu0
        %v1152 = vadd.f32 0.0, %v1151
        %v1153 = vpop.f32.mrb[0].mxu0
        %1154 = vmatprep.mubr.bf16.mxu0 %v542
        %1155 = vmatmul.mubr.bf16.gmra.mrb[0].mxu0 %v541
        %v1156 = vpop.f32.mrb[0].mxu0
        %v1157 = vadd.f32 0.0, %v1156
        %v1158 = vpop.f32.mrb[0].mxu0
        %v1159 = vpop.f32.mrb[0].mxu0
        %v1160 = vadd.f32 0.0, %v1159
        %v1161 = vpop.f32.mrb[0].mxu0
        %1162 = vmatprep.mubr.bf16.mxu0 %v544
        %1163 = vmatmul.mubr.bf16.gmra.mrb[0].mxu0 %v543
        %v1164 = vpop.f32.mrb[0].mxu0
        %v1165 = vadd.f32 0.0, %v1164
        %v1166 = vpop.f32.mrb[0].mxu0
        %v1167 = vpop.f32.mrb[0].mxu0
        %v1168 = vadd.f32 0.0, %v1167
        %v1169 = vpop.f32.mrb[0].mxu0
        %1170 = vmatprep.mubr.bf16.mxu0 %v546
        %1171 = vmatmul.mubr.bf16.gmra.mrb[0].mxu0 %v545
        %v1172 = vpop.f32.mrb[0].mxu0
        %v1173 = vadd.f32 0.0, %v1172
        %v1174 = vpop.f32.mrb[0].mxu0
        %v1175 = vpop.f32.mrb[0].mxu0
        %v1176 = vadd.f32 0.0, %v1175
        %v1177 = vpop.f32.mrb[0].mxu0
        %1178 = vmatprep.mubr.bf16.mxu0 %v548
        %1179 = vmatmul.mubr.bf16.gmra.mrb[0].mxu0 %v547
        %v1180 = vpop.f32.mrb[0].mxu0
        %v1181 = vadd.f32 0.0, %v1180
        %v1182 = vpop.f32.mrb[0].mxu0
        %v1183 = vpop.f32.mrb[0].mxu0
        %v1184 = vadd.f32 0.0, %v1183
        %v1185 = vpop.f32.mrb[0].mxu0
        %1186 = vmatprep.mubr.bf16.mxu0 %v550
        %1187 = vmatmul.mubr.bf16.gmra.mrb[0].mxu0 %v549
        %v1188 = vpop.f32.mrb[0].mxu0
        %v1189 = vadd.f32 0.0, %v1188
        %v1190 = vpop.f32.mrb[0].mxu0
        %v1191 = vpop.f32.mrb[0].mxu0
        %v1192 = vadd.f32 0.0, %v1191
        %v1193 = vpop.f32.mrb[0].mxu0
        %1194 = vmatprep.mubr.bf16.mxu0 %v552
        %1195 = vmatmul.mubr.bf16.gmra.mrb[0].mxu0 %v551
        %v1196 = vpop.f32.mrb[0].mxu0
        %v1197 = vadd.f32 0.0, %v1196
        %v1198 = vpop.f32.mrb[0].mxu0
        %v1199 = vpop.f32.mrb[0].mxu0
        %v1200 = vadd.f32 0.0, %v1199
        %v1201 = vpop.f32.mrb[0].mxu0
        %1202 = vmatprep.mubr.bf16.mxu0 %v554
        %1203 = vmatmul.mubr.bf16.gmra.mrb[0].mxu0 %v553
        %v1204 = vpop.f32.mrb[0].mxu0
        %v1205 = vadd.f32 0.0, %v1204
        %v1206 = vpop.f32.mrb[0].mxu0
        %v1207 = vpop.f32.mrb[0].mxu0
        %v1208 = vadd.f32 0.0, %v1207
        %v1209 = vpop.f32.mrb[0].mxu0
        %1210 = vmatprep.mubr.bf16.mxu0 %v556
        %1211 = vmatmul.mubr.bf16.gmra.mrb[0].mxu0 %v555
        %v1212 = vpop.f32.mrb[0].mxu0
        %v1213 = vadd.f32 0.0, %v1212
        %v1214 = vpop.f32.mrb[0].mxu0
        %v1215 = vpop.f32.mrb[0].mxu0
        %v1216 = vadd.f32 0.0, %v1215
        %v1217 = vpop.f32.mrb[0].mxu0
        %1218 = vmatprep.mubr.bf16.mxu0 %v558
        %1219 = vmatmul.mubr.bf16.gmra.mrb[0].mxu0 %v557
        %v1220 = vpop.f32.mrb[0].mxu0
        %v1221 = vadd.f32 0.0, %v1220
        %v1222 = vpop.f32.mrb[0].mxu0
        %v1223 = vpop.f32.mrb[0].mxu0
        %v1224 = vadd.f32 0.0, %v1223
        %v1225 = vpop.f32.mrb[0].mxu0
        %1226 = vmatprep.mubr.bf16.mxu0 %v560
        %1227 = vmatmul.mubr.bf16.gmra.mrb[0].mxu0 %v559
        %v1228 = vpop.f32.mrb[0].mxu0
        %v1229 = vadd.f32 0.0, %v1228
        %v1230 = vpop.f32.mrb[0].mxu0
        %v1231 = vpop.f32.mrb[0].mxu0
        %v1232 = vadd.f32 0.0, %v1231
        %v1233 = vpop.f32.mrb[0].mxu0
        %1234 = vdwg.mxu0
        %v1235 = vadd.f32 %v369, %v916
        %v1236 = vadd.f32 %v370, %v918
        %v1237 = vadd.f32 %v371, %v1109
        %v1238 = vadd.f32 %v372, %v920
        %v1239 = vadd.f32 %v373, %v922
        %v1240 = vadd.f32 %v374, %v1112
        %v1241 = vadd.f32 %v375, %v926
        %v1242 = vadd.f32 %v376, %v928
        %v1243 = vadd.f32 %v377, %v1117
        %v1244 = vadd.f32 %v378, %v930
        %v1245 = vadd.f32 %v379, %v932
        %v1246 = vadd.f32 %v380, %v1120
        %v1247 = vadd.f32 %v381, %v936
        %v1248 = vadd.f32 %v382, %v938
        %v1249 = vadd.f32 %v383, %v1125
        %v1250 = vadd.f32 %v384, %v940
        %v1251 = vadd.f32 %v385, %v942
        %v1252 = vadd.f32 %v386, %v1128
        %v1253 = vadd.f32 %v387, %v946
        %v1254 = vadd.f32 %v388, %v948
        %v1255 = vadd.f32 %v389, %v1133
        %v1256 = vadd.f32 %v390, %v950
        %v1257 = vadd.f32 %v391, %v952
        %v1258 = vadd.f32 %v392, %v1136
        %v1259 = vadd.f32 %v393, %v956
        %v1260 = vadd.f32 %v394, %v958
        %v1261 = vadd.f32 %v395, %v1141
        %v1262 = vadd.f32 %v396, %v960
        %v1263 = vadd.f32 %v397, %v962
        %v1264 = vadd.f32 %v398, %v1144
        %v1265 = vadd.f32 %v399, %v966
        %v1266 = vadd.f32 %v400, %v968
        %v1267 = vadd.f32 %v401, %v1149
        %v1268 = vadd.f32 %v402, %v970
        %v1269 = vadd.f32 %v403, %v972
        %v1270 = vadd.f32 %v404, %v1152
        %v1271 = vadd.f32 %v405, %v976
        %v1272 = vadd.f32 %v406, %v978
        %v1273 = vadd.f32 %v407, %v1157
        %v1274 = vadd.f32 %v408, %v980
        %v1275 = vadd.f32 %v409, %v982
        %v1276 = vadd.f32 %v410, %v1160
        %v1277 = vadd.f32 %v411, %v986
        %v1278 = vadd.f32 %v412, %v988
        %v1279 = vadd.f32 %v413, %v1165
        %v1280 = vadd.f32 %v414, %v990
        %v1281 = vadd.f32 %v415, %v992
        %v1282 = vadd.f32 %v416, %v1168
        %v1283 = vadd.f32 %v417, %v996
        %v1284 = vadd.f32 %v418, %v998
        %v1285 = vadd.f32 %v419, %v1173
        %v1286 = vadd.f32 %v420, %v1000
        %v1287 = vadd.f32 %v421, %v1002
        %v1288 = vadd.f32 %v422, %v1176
        %v1289 = vadd.f32 %v423, %v1006
        %v1290 = vadd.f32 %v424, %v1008
        %v1291 = vadd.f32 %v425, %v1181
        %v1292 = vadd.f32 %v426, %v1010
        %v1293 = vadd.f32 %v427, %v1012
        %v1294 = vadd.f32 %v428, %v1184
        %v1295 = vadd.f32 %v429, %v1016
        %v1296 = vadd.f32 %v430, %v1018
        %v1297 = vadd.f32 %v431, %v1189
        %v1298 = vadd.f32 %v432, %v1020
        %v1299 = vadd.f32 %v433, %v1022
        %v1300 = vadd.f32 %v434, %v1192
        %v1301 = vadd.f32 %v435, %v1026
        %v1302 = vadd.f32 %v436, %v1028
        %v1303 = vadd.f32 %v437, %v1197
        %v1304 = vadd.f32 %v438, %v1030
        %v1305 = vadd.f32 %v439, %v1032
        %v1306 = vadd.f32 %v440, %v1200
        %v1307 = vadd.f32 %v441, %v1036
        %v1308 = vadd.f32 %v442, %v1038
        %v1309 = vadd.f32 %v443, %v1205
        %v1310 = vadd.f32 %v444, %v1040
        %v1311 = vadd.f32 %v445, %v1042
        %v1312 = vadd.f32 %v446, %v1208
        %v1313 = vadd.f32 %v447, %v1046
        %v1314 = vadd.f32 %v448, %v1048
        %v1315 = vadd.f32 %v449, %v1213
        %v1316 = vadd.f32 %v450, %v1050
        %v1317 = vadd.f32 %v451, %v1052
        %v1318 = vadd.f32 %v452, %v1216
        %v1319 = vadd.f32 %v453, %v1056
        %v1320 = vadd.f32 %v454, %v1058
        %v1321 = vadd.f32 %v455, %v1221
        %v1322 = vadd.f32 %v456, %v1060
        %v1323 = vadd.f32 %v457, %v1062
        %v1324 = vadd.f32 %v458, %v1224
        %v1325 = vadd.f32 %v459, %v1066
        %v1326 = vadd.f32 %v460, %v1068
        %v1327 = vadd.f32 %v461, %v1229
        %v1328 = vadd.f32 %v462, %v1070
        %v1329 = vadd.f32 %v463, %v1072
        %v1330 = vadd.f32 %v464, %v1232
        %1331 = vst [vmem:[#allocation2] sm:$0xff] %v1235
        %1332 = vst [vmem:[#allocation2 + $0x8] sm:$0xff] %v1236
        %1333 = vst [vmem:[#allocation2 + $0x10] sm:$0xff] %v1237
        %1334 = vst [vmem:[#allocation2 + $0x18] sm:$0xff] %v1238
        %1335 = vst [vmem:[#allocation2 + $0x20] sm:$0xff] %v1239
        %1336 = vst [vmem:[#allocation2 + $0x28] sm:$0xff] %v1240
        %1337 = vst [vmem:[#allocation2 + $0x30] sm:$0xff] %v1241
        %1338 = vst [vmem:[#allocation2 + $0x38] sm:$0xff] %v1242
        %1339 = vst [vmem:[#allocation2 + $0x40] sm:$0xff] %v1243
        %1340 = vst [vmem:[#allocation2 + $0x48] sm:$0xff] %v1244
        %1341 = vst [vmem:[#allocation2 + $0x50] sm:$0xff] %v1245
        %1342 = vst [vmem:[#allocation2 + $0x58] sm:$0xff] %v1246
        %1343 = vst [vmem:[#allocation2 + $0x60] sm:$0xff] %v1247
        %1344 = vst [vmem:[#allocation2 + $0x68] sm:$0xff] %v1248
        %1345 = vst [vmem:[#allocation2 + $0x70] sm:$0xff] %v1249
        %1346 = vst [vmem:[#allocation2 + $0x78] sm:$0xff] %v1250
        %1347 = vst [vmem:[#allocation2 + $0x80] sm:$0xff] %v1251
        %1348 = vst [vmem:[#allocation2 + $0x88] sm:$0xff] %v1252
        %1349 = vst [vmem:[#allocation2 + $0x90] sm:$0xff] %v1253
        %1350 = vst [vmem:[#allocation2 + $0x98] sm:$0xff] %v1254
        %1351 = vst [vmem:[#allocation2 + $0xa0] sm:$0xff] %v1255
        %1352 = vst [vmem:[#allocation2 + $0xa8] sm:$0xff] %v1256
        %1353 = vst [vmem:[#allocation2 + $0xb0] sm:$0xff] %v1257
        %1354 = vst [vmem:[#allocation2 + $0xb8] sm:$0xff] %v1258
        %1355 = vst [vmem:[#allocation2 + $0xc0] sm:$0xff] %v1259
        %1356 = vst [vmem:[#allocation2 + $0xc8] sm:$0xff] %v1260
        %1357 = vst [vmem:[#allocation2 + $0xd0] sm:$0xff] %v1261
        %1358 = vst [vmem:[#allocation2 + $0xd8] sm:$0xff] %v1262
        %1359 = vst [vmem:[#allocation2 + $0xe0] sm:$0xff] %v1263
        %1360 = vst [vmem:[#allocation2 + $0xe8] sm:$0xff] %v1264
        %1361 = vst [vmem:[#allocation2 + $0xf0] sm:$0xff] %v1265
        %1362 = vst [vmem:[#allocation2 + $0xf8] sm:$0xff] %v1266
        %1363 = vst [vmem:[#allocation2 + $0x100] sm:$0xff] %v1267
        %1364 = vst [vmem:[#allocation2 + $0x108] sm:$0xff] %v1268
        %1365 = vst [vmem:[#allocation2 + $0x110] sm:$0xff] %v1269
        %1366 = vst [vmem:[#allocation2 + $0x118] sm:$0xff] %v1270
        %1367 = vst [vmem:[#allocation2 + $0x120] sm:$0xff] %v1271
        %1368 = vst [vmem:[#allocation2 + $0x128] sm:$0xff] %v1272
        %1369 = vst [vmem:[#allocation2 + $0x130] sm:$0xff] %v1273
        %1370 = vst [vmem:[#allocation2 + $0x138] sm:$0xff] %v1274
        %1371 = vst [vmem:[#allocation2 + $0x140] sm:$0xff] %v1275
        %1372 = vst [vmem:[#allocation2 + $0x148] sm:$0xff] %v1276
        %1373 = vst [vmem:[#allocation2 + $0x150] sm:$0xff] %v1277
        %1374 = vst [vmem:[#allocation2 + $0x158] sm:$0xff] %v1278
        %1375 = vst [vmem:[#allocation2 + $0x160] sm:$0xff] %v1279
        %1376 = vst [vmem:[#allocation2 + $0x168] sm:$0xff] %v1280
        %1377 = vst [vmem:[#allocation2 + $0x170] sm:$0xff] %v1281
        %1378 = vst [vmem:[#allocation2 + $0x178] sm:$0xff] %v1282
        %1379 = vst [vmem:[#allocation2 + $0x180] sm:$0xff] %v1283
        %1380 = vst [vmem:[#allocation2 + $0x188] sm:$0xff] %v1284
        %1381 = vst [vmem:[#allocation2 + $0x190] sm:$0xff] %v1285
        %1382 = vst [vmem:[#allocation2 + $0x198] sm:$0xff] %v1286
        %1383 = vst [vmem:[#allocation2 + $0x1a0] sm:$0xff] %v1287
        %1384 = vst [vmem:[#allocation2 + $0x1a8] sm:$0xff] %v1288
        %1385 = vst [vmem:[#allocation2 + $0x1b0] sm:$0xff] %v1289
        %1386 = vst [vmem:[#allocation2 + $0x1b8] sm:$0xff] %v1290
        %1387 = vst [vmem:[#allocation2 + $0x1c0] sm:$0xff] %v1291
        %1388 = vst [vmem:[#allocation2 + $0x1c8] sm:$0xff] %v1292
        %1389 = vst [vmem:[#allocation2 + $0x1d0] sm:$0xff] %v1293
        %1390 = vst [vmem:[#allocation2 + $0x1d8] sm:$0xff] %v1294
        %1391 = vst [vmem:[#allocation2 + $0x1e0] sm:$0xff] %v1295
        %1392 = vst [vmem:[#allocation2 + $0x1e8] sm:$0xff] %v1296
        %1393 = vst [vmem:[#allocation2 + $0x1f0] sm:$0xff] %v1297
        %1394 = vst [vmem:[#allocation2 + $0x1f8] sm:$0xff] %v1298
        %1395 = vst [vmem:[#allocation2 + $0x200] sm:$0xff] %v1299
        %1396 = vst [vmem:[#allocation2 + $0x208] sm:$0xff] %v1300
        %1397 = vst [vmem:[#allocation2 + $0x210] sm:$0xff] %v1301
        %1398 = vst [vmem:[#allocation2 + $0x218] sm:$0xff] %v1302
        %1399 = vst [vmem:[#allocation2 + $0x220] sm:$0xff] %v1303
        %1400 = vst [vmem:[#allocation2 + $0x228] sm:$0xff] %v1304
        %1401 = vst [vmem:[#allocation2 + $0x230] sm:$0xff] %v1305
        %1402 = vst [vmem:[#allocation2 + $0x238] sm:$0xff] %v1306
        %1403 = vst [vmem:[#allocation2 + $0x240] sm:$0xff] %v1307
        %1404 = vst [vmem:[#allocation2 + $0x248] sm:$0xff] %v1308
        %1405 = vst [vmem:[#allocation2 + $0x250] sm:$0xff] %v1309
        %1406 = vst [vmem:[#allocation2 + $0x258] sm:$0xff] %v1310
        %1407 = vst [vmem:[#allocation2 + $0x260] sm:$0xff] %v1311
        %1408 = vst [vmem:[#allocation2 + $0x268] sm:$0xff] %v1312
        %1409 = vst [vmem:[#allocation2 + $0x270] sm:$0xff] %v1313
        %1410 = vst [vmem:[#allocation2 + $0x278] sm:$0xff] %v1314
        %1411 = vst [vmem:[#allocation2 + $0x280] sm:$0xff] %v1315
        %1412 = vst [vmem:[#allocation2 + $0x288] sm:$0xff] %v1316
        %1413 = vst [vmem:[#allocation2 + $0x290] sm:$0xff] %v1317
        %1414 = vst [vmem:[#allocation2 + $0x298] sm:$0xff] %v1318
        %1415 = vst [vmem:[#allocation2 + $0x2a0] sm:$0xff] %v1319
        %1416 = vst [vmem:[#allocation2 + $0x2a8] sm:$0xff] %v1320
        %1417 = vst [vmem:[#allocation2 + $0x2b0] sm:$0xff] %v1321
        %1418 = vst [vmem:[#allocation2 + $0x2b8] sm:$0xff] %v1322
        %1419 = vst [vmem:[#allocation2 + $0x2c0] sm:$0xff] %v1323
        %1420 = vst [vmem:[#allocation2 + $0x2c8] sm:$0xff] %v1324
        %1421 = vst [vmem:[#allocation2 + $0x2d0] sm:$0xff] %v1325
        %1422 = vst [vmem:[#allocation2 + $0x2d8] sm:$0xff] %v1326
        %1423 = vst [vmem:[#allocation2 + $0x2e0] sm:$0xff] %v1327
        %1424 = vst [vmem:[#allocation2 + $0x2e8] sm:$0xff] %v1328
        %1425 = vst [vmem:[#allocation2 + $0x2f0] sm:$0xff] %v1329
        %1426 = vst [vmem:[#allocation2 + $0x2f8] sm:$0xff] %v1330
        // Predicated region
        $region45: #{tpu_custom_call.1} parent=31 // pred_check
          %p1427 = pneg %p269
        $region46: #{tpu_custom_call.1} parent=31 // pred_check_branch
          %1429 = sbr.rel (%p1427) target = $region48
        $region47: #{tpu_custom_call.1} parent=31 // pred_region
          %v1430 = vld [vmem:[#allocation2] sm:$0xff]
          %v1431 = vld [vmem:[#allocation2 + $0x8] sm:$0xff]
          %v1432 = vld [vmem:[#allocation2 + $0x10] sm:$0xff]
          %v1433 = vld [vmem:[#allocation2 + $0x18] sm:$0xff]
          %v1434 = vld [vmem:[#allocation2 + $0x20] sm:$0xff]
          %v1435 = vld [vmem:[#allocation2 + $0x28] sm:$0xff]
          %v1436 = vld [vmem:[#allocation2 + $0x30] sm:$0xff]
          %v1437 = vld [vmem:[#allocation2 + $0x38] sm:$0xff]
          %v1438 = vld [vmem:[#allocation2 + $0x40] sm:$0xff]
          %v1439 = vld [vmem:[#allocation2 + $0x48] sm:$0xff]
          %v1440 = vld [vmem:[#allocation2 + $0x50] sm:$0xff]
          %v1441 = vld [vmem:[#allocation2 + $0x58] sm:$0xff]
          %v1442 = vld [vmem:[#allocation2 + $0x60] sm:$0xff]
          %v1443 = vld [vmem:[#allocation2 + $0x68] sm:$0xff]
          %v1444 = vld [vmem:[#allocation2 + $0x70] sm:$0xff]
          %v1445 = vld [vmem:[#allocation2 + $0x78] sm:$0xff]
          %v1446 = vld [vmem:[#allocation2 + $0x80] sm:$0xff]
          %v1447 = vld [vmem:[#allocation2 + $0x88] sm:$0xff]
          %v1448 = vld [vmem:[#allocation2 + $0x90] sm:$0xff]
          %v1449 = vld [vmem:[#allocation2 + $0x98] sm:$0xff]
          %v1450 = vld [vmem:[#allocation2 + $0xa0] sm:$0xff]
          %v1451 = vld [vmem:[#allocation2 + $0xa8] sm:$0xff]
          %v1452 = vld [vmem:[#allocation2 + $0xb0] sm:$0xff]
          %v1453 = vld [vmem:[#allocation2 + $0xb8] sm:$0xff]
          %v1454 = vld [vmem:[#allocation2 + $0xc0] sm:$0xff]
          %v1455 = vld [vmem:[#allocation2 + $0xc8] sm:$0xff]
          %v1456 = vld [vmem:[#allocation2 + $0xd0] sm:$0xff]
          %v1457 = vld [vmem:[#allocation2 + $0xd8] sm:$0xff]
          %v1458 = vld [vmem:[#allocation2 + $0xe0] sm:$0xff]
          %v1459 = vld [vmem:[#allocation2 + $0xe8] sm:$0xff]
          %v1460 = vld [vmem:[#allocation2 + $0xf0] sm:$0xff]
          %v1461 = vld [vmem:[#allocation2 + $0xf8] sm:$0xff]
          %v1462 = vld [vmem:[#allocation2 + $0x100] sm:$0xff]
          %v1463 = vld [vmem:[#allocation2 + $0x108] sm:$0xff]
          %v1464 = vld [vmem:[#allocation2 + $0x110] sm:$0xff]
          %v1465 = vld [vmem:[#allocation2 + $0x118] sm:$0xff]
          %v1466 = vld [vmem:[#allocation2 + $0x120] sm:$0xff]
          %v1467 = vld [vmem:[#allocation2 + $0x128] sm:$0xff]
          %v1468 = vld [vmem:[#allocation2 + $0x130] sm:$0xff]
          %v1469 = vld [vmem:[#allocation2 + $0x138] sm:$0xff]
          %v1470 = vld [vmem:[#allocation2 + $0x140] sm:$0xff]
          %v1471 = vld [vmem:[#allocation2 + $0x148] sm:$0xff]
          %v1472 = vld [vmem:[#allocation2 + $0x150] sm:$0xff]
          %v1473 = vld [vmem:[#allocation2 + $0x158] sm:$0xff]
          %v1474 = vld [vmem:[#allocation2 + $0x160] sm:$0xff]
          %v1475 = vld [vmem:[#allocation2 + $0x168] sm:$0xff]
          %v1476 = vld [vmem:[#allocation2 + $0x170] sm:$0xff]
          %v1477 = vld [vmem:[#allocation2 + $0x178] sm:$0xff]
          %v1478 = vld [vmem:[#allocation2 + $0x180] sm:$0xff]
          %v1479 = vld [vmem:[#allocation2 + $0x188] sm:$0xff]
          %v1480 = vld [vmem:[#allocation2 + $0x190] sm:$0xff]
          %v1481 = vld [vmem:[#allocation2 + $0x198] sm:$0xff]
          %v1482 = vld [vmem:[#allocation2 + $0x1a0] sm:$0xff]
          %v1483 = vld [vmem:[#allocation2 + $0x1a8] sm:$0xff]
          %v1484 = vld [vmem:[#allocation2 + $0x1b0] sm:$0xff]
          %v1485 = vld [vmem:[#allocation2 + $0x1b8] sm:$0xff]
          %v1486 = vld [vmem:[#allocation2 + $0x1c0] sm:$0xff]
          %v1487 = vld [vmem:[#allocation2 + $0x1c8] sm:$0xff]
          %v1488 = vld [vmem:[#allocation2 + $0x1d0] sm:$0xff]
          %v1489 = vld [vmem:[#allocation2 + $0x1d8] sm:$0xff]
          %v1490 = vld [vmem:[#allocation2 + $0x1e0] sm:$0xff]
          %v1491 = vld [vmem:[#allocation2 + $0x1e8] sm:$0xff]
          %v1492 = vld [vmem:[#allocation2 + $0x1f0] sm:$0xff]
          %v1493 = vld [vmem:[#allocation2 + $0x1f8] sm:$0xff]
          %v1494 = vld [vmem:[#allocation2 + $0x200] sm:$0xff]
          %v1495 = vld [vmem:[#allocation2 + $0x208] sm:$0xff]
          %v1496 = vld [vmem:[#allocation2 + $0x210] sm:$0xff]
          %v1497 = vld [vmem:[#allocation2 + $0x218] sm:$0xff]
          %v1498 = vld [vmem:[#allocation2 + $0x220] sm:$0xff]
          %v1499 = vld [vmem:[#allocation2 + $0x228] sm:$0xff]
          %v1500 = vld [vmem:[#allocation2 + $0x230] sm:$0xff]
          %v1501 = vld [vmem:[#allocation2 + $0x238] sm:$0xff]
          %v1502 = vld [vmem:[#allocation2 + $0x240] sm:$0xff]
          %v1503 = vld [vmem:[#allocation2 + $0x248] sm:$0xff]
          %v1504 = vld [vmem:[#allocation2 + $0x250] sm:$0xff]
          %v1505 = vld [vmem:[#allocation2 + $0x258] sm:$0xff]
          %v1506 = vld [vmem:[#allocation2 + $0x260] sm:$0xff]
          %v1507 = vld [vmem:[#allocation2 + $0x268] sm:$0xff]
          %v1508 = vld [vmem:[#allocation2 + $0x270] sm:$0xff]
          %v1509 = vld [vmem:[#allocation2 + $0x278] sm:$0xff]
          %v1510 = vld [vmem:[#allocation2 + $0x280] sm:$0xff]
          %v1511 = vld [vmem:[#allocation2 + $0x288] sm:$0xff]
          %v1512 = vld [vmem:[#allocation2 + $0x290] sm:$0xff]
          %v1513 = vld [vmem:[#allocation2 + $0x298] sm:$0xff]
          %v1514 = vld [vmem:[#allocation2 + $0x2a0] sm:$0xff]
          %v1515 = vld [vmem:[#allocation2 + $0x2a8] sm:$0xff]
          %v1516 = vld [vmem:[#allocation2 + $0x2b0] sm:$0xff]
          %v1517 = vld [vmem:[#allocation2 + $0x2b8] sm:$0xff]
          %v1518 = vld [vmem:[#allocation2 + $0x2c0] sm:$0xff]
          %v1519 = vld [vmem:[#allocation2 + $0x2c8] sm:$0xff]
          %v1520 = vld [vmem:[#allocation2 + $0x2d0] sm:$0xff]
          %v1521 = vld [vmem:[#allocation2 + $0x2d8] sm:$0xff]
          %v1522 = vld [vmem:[#allocation2 + $0x2e0] sm:$0xff]
          %v1523 = vld [vmem:[#allocation2 + $0x2e8] sm:$0xff]
          %v1524 = vld [vmem:[#allocation2 + $0x2f0] sm:$0xff]
          %v1525 = vld [vmem:[#allocation2 + $0x2f8] sm:$0xff]
          %v1526 = vld [vmem:[%s264] sm:$0x7]
          %v1528 = vlaneseq
          %v1529 = vshrl.u32 %v1528, 7
          %v1530 = vsub.s32 0, %v1529
          %v1531 = vrot.slane %v1526, %v1530
          %v1532 = vlaneseq
          %v1533 = vshrl.u32 %v1532, 7
          %v1534 = vsub.s32 1, %v1533
          %v1535 = vrot.slane %v1526, %v1534
          %v1536 = vlaneseq
          %v1537 = vshrl.u32 %v1536, 7
          %v1538 = vsub.s32 2, %v1537
          %v1539 = vrot.slane %v1526, %v1538
          %v1543 = vadd.f32 %v1430, %v1531
          %v1544 = vadd.f32 %v1431, %v1535
          %v1545 = vadd.f32 %v1432, %v1539
          %v1546 = vadd.f32 %v1433, %v1531
          %v1547 = vadd.f32 %v1434, %v1535
          %v1548 = vadd.f32 %v1435, %v1539
          %v1549 = vadd.f32 %v1436, %v1531
          %v1550 = vadd.f32 %v1437, %v1535
          %v1551 = vadd.f32 %v1438, %v1539
          %v1552 = vadd.f32 %v1439, %v1531
          %v1553 = vadd.f32 %v1440, %v1535
          %v1554 = vadd.f32 %v1441, %v1539
          %v1555 = vadd.f32 %v1442, %v1531
          %v1556 = vadd.f32 %v1443, %v1535
          %v1557 = vadd.f32 %v1444, %v1539
          %v1558 = vadd.f32 %v1445, %v1531
          %v1559 = vadd.f32 %v1446, %v1535
          %v1560 = vadd.f32 %v1447, %v1539
          %v1561 = vadd.f32 %v1448, %v1531
          %v1562 = vadd.f32 %v1449, %v1535
          %v1563 = vadd.f32 %v1450, %v1539
          %v1564 = vadd.f32 %v1451, %v1531
          %v1565 = vadd.f32 %v1452, %v1535
          %v1566 = vadd.f32 %v1453, %v1539
          %v1567 = vadd.f32 %v1454, %v1531
          %v1568 = vadd.f32 %v1455, %v1535
          %v1569 = vadd.f32 %v1456, %v1539
          %v1570 = vadd.f32 %v1457, %v1531
          %v1571 = vadd.f32 %v1458, %v1535
          %v1572 = vadd.f32 %v1459, %v1539
          %v1573 = vadd.f32 %v1460, %v1531
          %v1574 = vadd.f32 %v1461, %v1535
          %v1575 = vadd.f32 %v1462, %v1539
          %v1576 = vadd.f32 %v1463, %v1531
          %v1577 = vadd.f32 %v1464, %v1535
          %v1578 = vadd.f32 %v1465, %v1539
          %v1579 = vadd.f32 %v1466, %v1531
          %v1580 = vadd.f32 %v1467, %v1535
          %v1581 = vadd.f32 %v1468, %v1539
          %v1582 = vadd.f32 %v1469, %v1531
          %v1583 = vadd.f32 %v1470, %v1535
          %v1584 = vadd.f32 %v1471, %v1539
          %v1585 = vadd.f32 %v1472, %v1531
          %v1586 = vadd.f32 %v1473, %v1535
          %v1587 = vadd.f32 %v1474, %v1539
          %v1588 = vadd.f32 %v1475, %v1531
          %v1589 = vadd.f32 %v1476, %v1535
          %v1590 = vadd.f32 %v1477, %v1539
          %v1591 = vadd.f32 %v1478, %v1531
          %v1592 = vadd.f32 %v1479, %v1535
          %v1593 = vadd.f32 %v1480, %v1539
          %v1594 = vadd.f32 %v1481, %v1531
          %v1595 = vadd.f32 %v1482, %v1535
          %v1596 = vadd.f32 %v1483, %v1539
          %v1597 = vadd.f32 %v1484, %v1531
          %v1598 = vadd.f32 %v1485, %v1535
          %v1599 = vadd.f32 %v1486, %v1539
          %v1600 = vadd.f32 %v1487, %v1531
          %v1601 = vadd.f32 %v1488, %v1535
          %v1602 = vadd.f32 %v1489, %v1539
          %v1603 = vadd.f32 %v1490, %v1531
          %v1604 = vadd.f32 %v1491, %v1535
          %v1605 = vadd.f32 %v1492, %v1539
          %v1606 = vadd.f32 %v1493, %v1531
          %v1607 = vadd.f32 %v1494, %v1535
          %v1608 = vadd.f32 %v1495, %v1539
          %v1609 = vadd.f32 %v1496, %v1531
          %v1610 = vadd.f32 %v1497, %v1535
          %v1611 = vadd.f32 %v1498, %v1539
          %v1612 = vadd.f32 %v1499, %v1531
          %v1613 = vadd.f32 %v1500, %v1535
          %v1614 = vadd.f32 %v1501, %v1539
          %v1615 = vadd.f32 %v1502, %v1531
          %v1616 = vadd.f32 %v1503, %v1535
          %v1617 = vadd.f32 %v1504, %v1539
          %v1618 = vadd.f32 %v1505, %v1531
          %v1619 = vadd.f32 %v1506, %v1535
          %v1620 = vadd.f32 %v1507, %v1539
          %v1621 = vadd.f32 %v1508, %v1531
          %v1622 = vadd.f32 %v1509, %v1535
          %v1623 = vadd.f32 %v1510, %v1539
          %v1624 = vadd.f32 %v1511, %v1531
          %v1625 = vadd.f32 %v1512, %v1535
          %v1626 = vadd.f32 %v1513, %v1539
          %v1627 = vadd.f32 %v1514, %v1531
          %v1628 = vadd.f32 %v1515, %v1535
          %v1629 = vadd.f32 %v1516, %v1539
          %v1630 = vadd.f32 %v1517, %v1531
          %v1631 = vadd.f32 %v1518, %v1535
          %v1632 = vadd.f32 %v1519, %v1539
          %v1633 = vadd.f32 %v1520, %v1531
          %v1634 = vadd.f32 %v1521, %v1535
          %v1635 = vadd.f32 %v1522, %v1539
          %v1636 = vadd.f32 %v1523, %v1531
          %v1637 = vadd.f32 %v1524, %v1535
          %v1638 = vadd.f32 %v1525, %v1539
          %v1639 = vpack.c.bf16 %v1546, %v1543
          %v1640 = vpack.c.bf16 %v1547, %v1544
          %v1641 = vpack.c.bf16 %v1548, %v1545
          %v1642 = vpack.c.bf16 %v1552, %v1549
          %v1643 = vpack.c.bf16 %v1553, %v1550
          %v1644 = vpack.c.bf16 %v1554, %v1551
          %v1645 = vpack.c.bf16 %v1558, %v1555
          %v1646 = vpack.c.bf16 %v1559, %v1556
          %v1647 = vpack.c.bf16 %v1560, %v1557
          %v1648 = vpack.c.bf16 %v1564, %v1561
          %v1649 = vpack.c.bf16 %v1565, %v1562
          %v1650 = vpack.c.bf16 %v1566, %v1563
          %v1651 = vpack.c.bf16 %v1570, %v1567
          %v1652 = vpack.c.bf16 %v1571, %v1568
          %v1653 = vpack.c.bf16 %v1572, %v1569
          %v1654 = vpack.c.bf16 %v1576, %v1573
          %v1655 = vpack.c.bf16 %v1577, %v1574
          %v1656 = vpack.c.bf16 %v1578, %v1575
          %v1657 = vpack.c.bf16 %v1582, %v1579
          %v1658 = vpack.c.bf16 %v1583, %v1580
          %v1659 = vpack.c.bf16 %v1584, %v1581
          %v1660 = vpack.c.bf16 %v1588, %v1585
          %v1661 = vpack.c.bf16 %v1589, %v1586
          %v1662 = vpack.c.bf16 %v1590, %v1587
          %v1663 = vpack.c.bf16 %v1594, %v1591
          %v1664 = vpack.c.bf16 %v1595, %v1592
          %v1665 = vpack.c.bf16 %v1596, %v1593
          %v1666 = vpack.c.bf16 %v1600, %v1597
          %v1667 = vpack.c.bf16 %v1601, %v1598
          %v1668 = vpack.c.bf16 %v1602, %v1599
          %v1669 = vpack.c.bf16 %v1606, %v1603
          %v1670 = vpack.c.bf16 %v1607, %v1604
          %v1671 = vpack.c.bf16 %v1608, %v1605
          %v1672 = vpack.c.bf16 %v1612, %v1609
          %v1673 = vpack.c.bf16 %v1613, %v1610
          %v1674 = vpack.c.bf16 %v1614, %v1611
          %v1675 = vpack.c.bf16 %v1618, %v1615
          %v1676 = vpack.c.bf16 %v1619, %v1616
          %v1677 = vpack.c.bf16 %v1620, %v1617
          %v1678 = vpack.c.bf16 %v1624, %v1621
          %v1679 = vpack.c.bf16 %v1625, %v1622
          %v1680 = vpack.c.bf16 %v1626, %v1623
          %v1681 = vpack.c.bf16 %v1630, %v1627
          %v1682 = vpack.c.bf16 %v1631, %v1628
          %v1683 = vpack.c.bf16 %v1632, %v1629
          %v1684 = vpack.c.bf16 %v1636, %v1633
          %v1685 = vpack.c.bf16 %v1637, %v1634
          %v1686 = vpack.c.bf16 %v1638, %v1635
          %v1735 = vunpack.c.l.b16 %v1639
          %v1736 = vunpack.c.l.b16 %v1640
          %v1737 = vunpack.c.l.b16 %v1641
          %v1738 = vunpack.c.h.b16 %v1639
          %v1739 = vunpack.c.h.b16 %v1640
          %v1740 = vunpack.c.h.b16 %v1641
          %v1741 = vunpack.c.l.b16 %v1642
          %v1742 = vunpack.c.l.b16 %v1643
          %v1743 = vunpack.c.l.b16 %v1644
          %v1744 = vunpack.c.h.b16 %v1642
          %v1745 = vunpack.c.h.b16 %v1643
          %v1746 = vunpack.c.h.b16 %v1644
          %v1747 = vunpack.c.l.b16 %v1645
          %v1748 = vunpack.c.l.b16 %v1646
          %v1749 = vunpack.c.l.b16 %v1647
          %v1750 = vunpack.c.h.b16 %v1645
          %v1751 = vunpack.c.h.b16 %v1646
          %v1752 = vunpack.c.h.b16 %v1647
          %v1753 = vunpack.c.l.b16 %v1648
          %v1754 = vunpack.c.l.b16 %v1649
          %v1755 = vunpack.c.l.b16 %v1650
          %v1756 = vunpack.c.h.b16 %v1648
          %v1757 = vunpack.c.h.b16 %v1649
          %v1758 = vunpack.c.h.b16 %v1650
          %v1759 = vunpack.c.l.b16 %v1651
          %v1760 = vunpack.c.l.b16 %v1652
          %v1761 = vunpack.c.l.b16 %v1653
          %v1762 = vunpack.c.h.b16 %v1651
          %v1763 = vunpack.c.h.b16 %v1652
          %v1764 = vunpack.c.h.b16 %v1653
          %v1765 = vunpack.c.l.b16 %v1654
          %v1766 = vunpack.c.l.b16 %v1655
          %v1767 = vunpack.c.l.b16 %v1656
          %v1768 = vunpack.c.h.b16 %v1654
          %v1769 = vunpack.c.h.b16 %v1655
          %v1770 = vunpack.c.h.b16 %v1656
          %v1771 = vunpack.c.l.b16 %v1657
          %v1772 = vunpack.c.l.b16 %v1658
          %v1773 = vunpack.c.l.b16 %v1659
          %v1774 = vunpack.c.h.b16 %v1657
          %v1775 = vunpack.c.h.b16 %v1658
          %v1776 = vunpack.c.h.b16 %v1659
          %v1777 = vunpack.c.l.b16 %v1660
          %v1778 = vunpack.c.l.b16 %v1661
          %v1779 = vunpack.c.l.b16 %v1662
          %v1780 = vunpack.c.h.b16 %v1660
          %v1781 = vunpack.c.h.b16 %v1661
          %v1782 = vunpack.c.h.b16 %v1662
          %v1783 = vunpack.c.l.b16 %v1663
          %v1784 = vunpack.c.l.b16 %v1664
          %v1785 = vunpack.c.l.b16 %v1665
          %v1786 = vunpack.c.h.b16 %v1663
          %v1787 = vunpack.c.h.b16 %v1664
          %v1788 = vunpack.c.h.b16 %v1665
          %v1789 = vunpack.c.l.b16 %v1666
          %v1790 = vunpack.c.l.b16 %v1667
          %v1791 = vunpack.c.l.b16 %v1668
          %v1792 = vunpack.c.h.b16 %v1666
          %v1793 = vunpack.c.h.b16 %v1667
          %v1794 = vunpack.c.h.b16 %v1668
          %v1795 = vunpack.c.l.b16 %v1669
          %v1796 = vunpack.c.l.b16 %v1670
          %v1797 = vunpack.c.l.b16 %v1671
          %v1798 = vunpack.c.h.b16 %v1669
          %v1799 = vunpack.c.h.b16 %v1670
          %v1800 = vunpack.c.h.b16 %v1671
          %v1801 = vunpack.c.l.b16 %v1672
          %v1802 = vunpack.c.l.b16 %v1673
          %v1803 = vunpack.c.l.b16 %v1674
          %v1804 = vunpack.c.h.b16 %v1672
          %v1805 = vunpack.c.h.b16 %v1673
          %v1806 = vunpack.c.h.b16 %v1674
          %v1807 = vunpack.c.l.b16 %v1675
          %v1808 = vunpack.c.l.b16 %v1676
          %v1809 = vunpack.c.l.b16 %v1677
          %v1810 = vunpack.c.h.b16 %v1675
          %v1811 = vunpack.c.h.b16 %v1676
          %v1812 = vunpack.c.h.b16 %v1677
          %v1813 = vunpack.c.l.b16 %v1678
          %v1814 = vunpack.c.l.b16 %v1679
          %v1815 = vunpack.c.l.b16 %v1680
          %v1816 = vunpack.c.h.b16 %v1678
          %v1817 = vunpack.c.h.b16 %v1679
          %v1818 = vunpack.c.h.b16 %v1680
          %v1819 = vunpack.c.l.b16 %v1681
          %v1820 = vunpack.c.l.b16 %v1682
          %v1821 = vunpack.c.l.b16 %v1683
          %v1822 = vunpack.c.h.b16 %v1681
          %v1823 = vunpack.c.h.b16 %v1682
          %v1824 = vunpack.c.h.b16 %v1683
          %v1825 = vunpack.c.l.b16 %v1684
          %v1826 = vunpack.c.l.b16 %v1685
          %v1827 = vunpack.c.l.b16 %v1686
          %v1828 = vunpack.c.h.b16 %v1684
          %v1829 = vunpack.c.h.b16 %v1685
          %v1830 = vunpack.c.h.b16 %v1686
          %v1831 = vpack.c.b16 %v1736, %v1735
          %v1832 = vpack.c.b16 %v1737, %v1737
          %v1833 = vpack.c.b16 %v1739, %v1738
          %v1834 = vpack.c.b16 %v1740, %v1740
          %v1835 = vpack.c.b16 %v1742, %v1741
          %v1836 = vpack.c.b16 %v1743, %v1743
          %v1837 = vpack.c.b16 %v1745, %v1744
          %v1838 = vpack.c.b16 %v1746, %v1746
          %v1839 = vpack.c.b16 %v1748, %v1747
          %v1840 = vpack.c.b16 %v1749, %v1749
          %v1841 = vpack.c.b16 %v1751, %v1750
          %v1842 = vpack.c.b16 %v1752, %v1752
          %v1843 = vpack.c.b16 %v1754, %v1753
          %v1844 = vpack.c.b16 %v1755, %v1755
          %v1845 = vpack.c.b16 %v1757, %v1756
          %v1846 = vpack.c.b16 %v1758, %v1758
          %v1847 = vpack.c.b16 %v1760, %v1759
          %v1848 = vpack.c.b16 %v1761, %v1761
          %v1849 = vpack.c.b16 %v1763, %v1762
          %v1850 = vpack.c.b16 %v1764, %v1764
          %v1851 = vpack.c.b16 %v1766, %v1765
          %v1852 = vpack.c.b16 %v1767, %v1767
          %v1853 = vpack.c.b16 %v1769, %v1768
          %v1854 = vpack.c.b16 %v1770, %v1770
          %v1855 = vpack.c.b16 %v1772, %v1771
          %v1856 = vpack.c.b16 %v1773, %v1773
          %v1857 = vpack.c.b16 %v1775, %v1774
          %v1858 = vpack.c.b16 %v1776, %v1776
          %v1859 = vpack.c.b16 %v1778, %v1777
          %v1860 = vpack.c.b16 %v1779, %v1779
          %v1861 = vpack.c.b16 %v1781, %v1780
          %v1862 = vpack.c.b16 %v1782, %v1782
          %v1863 = vpack.c.b16 %v1784, %v1783
          %v1864 = vpack.c.b16 %v1785, %v1785
          %v1865 = vpack.c.b16 %v1787, %v1786
          %v1866 = vpack.c.b16 %v1788, %v1788
          %v1867 = vpack.c.b16 %v1790, %v1789
          %v1868 = vpack.c.b16 %v1791, %v1791
          %v1869 = vpack.c.b16 %v1793, %v1792
          %v1870 = vpack.c.b16 %v1794, %v1794
          %v1871 = vpack.c.b16 %v1796, %v1795
          %v1872 = vpack.c.b16 %v1797, %v1797
          %v1873 = vpack.c.b16 %v1799, %v1798
          %v1874 = vpack.c.b16 %v1800, %v1800
          %v1875 = vpack.c.b16 %v1802, %v1801
          %v1876 = vpack.c.b16 %v1803, %v1803
          %v1877 = vpack.c.b16 %v1805, %v1804
          %v1878 = vpack.c.b16 %v1806, %v1806
          %v1879 = vpack.c.b16 %v1808, %v1807
          %v1880 = vpack.c.b16 %v1809, %v1809
          %v1881 = vpack.c.b16 %v1811, %v1810
          %v1882 = vpack.c.b16 %v1812, %v1812
          %v1883 = vpack.c.b16 %v1814, %v1813
          %v1884 = vpack.c.b16 %v1815, %v1815
          %v1885 = vpack.c.b16 %v1817, %v1816
          %v1886 = vpack.c.b16 %v1818, %v1818
          %v1887 = vpack.c.b16 %v1820, %v1819
          %v1888 = vpack.c.b16 %v1821, %v1821
          %v1889 = vpack.c.b16 %v1823, %v1822
          %v1890 = vpack.c.b16 %v1824, %v1824
          %v1891 = vpack.c.b16 %v1826, %v1825
          %v1892 = vpack.c.b16 %v1827, %v1827
          %v1893 = vpack.c.b16 %v1829, %v1828
          %v1894 = vpack.c.b16 %v1830, %v1830
          %1959 = vst [vmem:[%s256] sm:$0xff] %v1831
          %1960 = vst [vmem:[%s256 + $0x8] sm:$0xf] %v1832
          %1961 = vst [vmem:[%s256 + $0xc] sm:$0xff] %v1833
          %1962 = vst [vmem:[%s256 + $0x14] sm:$0xf] %v1834
          %1963 = vst [vmem:[%s256 + $0x18] sm:$0xff] %v1835
          %1964 = vst [vmem:[%s256 + $0x20] sm:$0xf] %v1836
          %1965 = vst [vmem:[%s256 + $0x24] sm:$0xff] %v1837
          %1966 = vst [vmem:[%s256 + $0x2c] sm:$0xf] %v1838
          %1967 = vst [vmem:[%s256 + $0x30] sm:$0xff] %v1839
          %1968 = vst [vmem:[%s256 + $0x38] sm:$0xf] %v1840
          %1969 = vst [vmem:[%s256 + $0x3c] sm:$0xff] %v1841
          %1970 = vst [vmem:[%s256 + $0x44] sm:$0xf] %v1842
          %1971 = vst [vmem:[%s256 + $0x48] sm:$0xff] %v1843
          %1972 = vst [vmem:[%s256 + $0x50] sm:$0xf] %v1844
          %1973 = vst [vmem:[%s256 + $0x54] sm:$0xff] %v1845
          %1974 = vst [vmem:[%s256 + $0x5c] sm:$0xf] %v1846
          %1975 = vst [vmem:[%s256 + $0x60] sm:$0xff] %v1847
          %1976 = vst [vmem:[%s256 + $0x68] sm:$0xf] %v1848
          %1977 = vst [vmem:[%s256 + $0x6c] sm:$0xff] %v1849
          %1978 = vst [vmem:[%s256 + $0x74] sm:$0xf] %v1850
          %1979 = vst [vmem:[%s256 + $0x78] sm:$0xff] %v1851
          %1980 = vst [vmem:[%s256 + $0x80] sm:$0xf] %v1852
          %1981 = vst [vmem:[%s256 + $0x84] sm:$0xff] %v1853
          %1982 = vst [vmem:[%s256 + $0x8c] sm:$0xf] %v1854
          %1983 = vst [vmem:[%s256 + $0x90] sm:$0xff] %v1855
          %1984 = vst [vmem:[%s256 + $0x98] sm:$0xf] %v1856
          %1985 = vst [vmem:[%s256 + $0x9c] sm:$0xff] %v1857
          %1986 = vst [vmem:[%s256 + $0xa4] sm:$0xf] %v1858
          %1987 = vst [vmem:[%s256 + $0xa8] sm:$0xff] %v1859
          %1988 = vst [vmem:[%s256 + $0xb0] sm:$0xf] %v1860
          %1989 = vst [vmem:[%s256 + $0xb4] sm:$0xff] %v1861
          %1990 = vst [vmem:[%s256 + $0xbc] sm:$0xf] %v1862
          %1991 = vst [vmem:[%s256 + $0xc0] sm:$0xff] %v1863
          %1992 = vst [vmem:[%s256 + $0xc8] sm:$0xf] %v1864
          %1993 = vst [vmem:[%s256 + $0xcc] sm:$0xff] %v1865
          %1994 = vst [vmem:[%s256 + $0xd4] sm:$0xf] %v1866
          %1995 = vst [vmem:[%s256 + $0xd8] sm:$0xff] %v1867
          %1996 = vst [vmem:[%s256 + $0xe0] sm:$0xf] %v1868
          %1997 = vst [vmem:[%s256 + $0xe4] sm:$0xff] %v1869
          %1998 = vst [vmem:[%s256 + $0xec] sm:$0xf] %v1870
          %1999 = vst [vmem:[%s256 + $0xf0] sm:$0xff] %v1871
          %2000 = vst [vmem:[%s256 + $0xf8] sm:$0xf] %v1872
          %2001 = vst [vmem:[%s256 + $0xfc] sm:$0xff] %v1873
          %2002 = vst [vmem:[%s256 + $0x104] sm:$0xf] %v1874
          %2003 = vst [vmem:[%s256 + $0x108] sm:$0xff] %v1875
          %2004 = vst [vmem:[%s256 + $0x110] sm:$0xf] %v1876
          %2005 = vst [vmem:[%s256 + $0x114] sm:$0xff] %v1877
          %2006 = vst [vmem:[%s256 + $0x11c] sm:$0xf] %v1878
          %2007 = vst [vmem:[%s256 + $0x120] sm:$0xff] %v1879
          %2008 = vst [vmem:[%s256 + $0x128] sm:$0xf] %v1880
          %2009 = vst [vmem:[%s256 + $0x12c] sm:$0xff] %v1881
          %2010 = vst [vmem:[%s256 + $0x134] sm:$0xf] %v1882
          %2011 = vst [vmem:[%s256 + $0x138] sm:$0xff] %v1883
          %2012 = vst [vmem:[%s256 + $0x140] sm:$0xf] %v1884
          %2013 = vst [vmem:[%s256 + $0x144] sm:$0xff] %v1885
          %2014 = vst [vmem:[%s256 + $0x14c] sm:$0xf] %v1886
          %2015 = vst [vmem:[%s256 + $0x150] sm:$0xff] %v1887
          %2016 = vst [vmem:[%s256 + $0x158] sm:$0xf] %v1888
          %2017 = vst [vmem:[%s256 + $0x15c] sm:$0xff] %v1889
          %2018 = vst [vmem:[%s256 + $0x164] sm:$0xf] %v1890
          %2019 = vst [vmem:[%s256 + $0x168] sm:$0xff] %v1891
          %2020 = vst [vmem:[%s256 + $0x170] sm:$0xf] %v1892
          %2021 = vst [vmem:[%s256 + $0x174] sm:$0xff] %v1893
          %2022 = vst [vmem:[%s256 + $0x17c] sm:$0xf] %v1894
        $region48: #{tpu_custom_call.1} parent=31 // pred_fallthru
          _
        %s2023 = sand.u32 %s132, 1
        %s2024 = scalar_lea.sflag [#allocation5], %s2023
        %s2025 = sand.u32 %s132, 1
        %s2026 = smul.addr %s2025, 384
        %s2027 = scalar_lea.vmem [#allocation8], %s2026
        // Predicated region
        $region49: #{tpu_custom_call.1} parent=31 // pred_check
          %p2028 = pneg %p142
        $region50: #{tpu_custom_call.1} parent=31 // pred_check_branch
          %2030 = sbr.rel (%p2028) target = $region52
        $region51: #{tpu_custom_call.1} parent=31 // pred_region
          %s2031 = smul.u32 32, %s26
          %s2032 = smul.u32 3, %s27
          %s2034 = ssub.s32 6144, 6144
          %2035 = vsyncadd %s2024, %s2034
          %s2036 = smul.addr %s2031, 6
          %s2037 = sadd.s32 %s2032, %s2036
          %s2038 = smul.addr %s2037, 64
          %s2039 = scalar_lea.hbm %s3, %s2038
          %s2040 = sshll.u32 %s2027, 4
          %s2041 = int_to_ptr.vmem [resolvable:$true] %s2040
          %2046 = dma.vmem_to_hbm [thread:$0]  %s2041, 6144, %s2039, %s2024, 192, 384, 12
        $region52: #{tpu_custom_call.1} parent=31 // pred_fallthru
          _
      $region32: #{tpu_custom_call.1} parent=5 // pred_fallthru
        _
      %p2047 = scmp.le.s32.totalorder 2, %s16
      // Predicated region
      $region53: #{tpu_custom_call.1} parent=5 // pred_check
        %p2048 = pneg %p2047
      $region54: #{tpu_custom_call.1} parent=5 // pred_check_branch
        %2050 = sbr.rel (%p2048) target = $region56
      $region55: #{tpu_custom_call.1} parent=5 // pred_region
        %s2051 = ssub.s32 %s16, 2
        // Predicated region
        $region57: #{tpu_custom_call.1} parent=55 // pred_check
          %p2052 = pneg %p148
        $region58: #{tpu_custom_call.1} parent=55 // pred_check_branch
          %2054 = sbr.rel (%p2052) target = $region60
        $region59: #{tpu_custom_call.1} parent=55 // pred_region
          %s2055 = sand.u32 %s133, 1
          %s2056 = scalar_lea.sflag [#allocation5], %s2055
          %s2057 = sand.u32 %s133, 1
          %s2058 = smul.addr %s2057, 384
          %s2059 = scalar_lea.vmem [#allocation8], %s2058
          %2060 = dma.done %s2056, 6144
        $region60: #{tpu_custom_call.1} parent=55 // pred_fallthru
          _
      $region56: #{tpu_custom_call.1} parent=5 // pred_fallthru
        _
    $region6: #{tpu_custom_call.1} parent=1 // loop_footer
      %s20 = sadd.s32 1, %s16
    $region7: #{tpu_custom_call.1} parent=1 // loop_footer_branch
      %15 = sbr.rel target = $region3
    $region8: #{tpu_custom_call.1} parent=1 // loop_exit
      _
    %2061 = vsyncpa [#allocation4], 1
    %s2062 = scalar_lea.sflag [#allocation4], 1
    %2063 = vsyncpa %s2062, 1
    %2064 = vsyncpa [#allocation7], 1
    %s2065 = scalar_lea.sflag [#allocation7], 1
    %2066 = vsyncpa %s2065, 1
    %2067 = vsyncpa [#allocation5], 1
    %s2068 = scalar_lea.sflag [#allocation5], 1
    %2069 = vsyncpa %s2068, 1

</llo_original>
